<compile_context>
chip_gen: v6e
topology: v6e:2x2x1
jax: 0.10.0
libtpu: 0.0.40
codegen_flags: <defaults>
</compile_context>

<pallas_src>
import functools

import jax
import jax.numpy as jnp
from jax.experimental import pallas as pl
from jax.experimental.pallas import tpu as pltpu


# ----------------------------------------------------------------------------
# Fused decoder-layer kernel: grid = (batch, query-tile).
# ----------------------------------------------------------------------------
def _decoder_layer_kernel(x_ref, mask_ref,
                          wqkv_ref, bqkv_ref,
                          wo_ref, bo_ref,
                          w1_ref, b1_ref, w2_ref, b2_ref,
                          g1_ref, be1_ref, g2_ref, be2_ref,
                          y_ref, attn_ref, scores_ref,
                          q_s, k_s, v_s,
                          *, num_head, dim_head, tq, eps):
    E = num_head * dim_head
    qi = pl.program_id(1)

    # ---- once per batch element: fused Q/K/V projection into bf16 scratch --
    # (sqrt(dim_head) scaling is pre-folded into the Q weights/bias.)
    @pl.when(qi == 0)
    def _():
        x_bf = x_ref[0].astype(jnp.bfloat16)                        # (S, E)
        qkv = jnp.dot(x_bf, wqkv_ref[...],
                      preferred_element_type=jnp.float32) + bqkv_ref[0]
        qkv = qkv.astype(jnp.bfloat16)          # drop the f32 copy immediately
        q_s[...] = qkv[:, :E]
        k_s[...] = qkv[:, E:2 * E]
        v_s[...] = qkv[:, 2 * E:]

    # ---- per query tile -----------------------------------------------------
    q_start = pl.multiple_of(qi * tq, tq)
    x_tile = x_ref[0, pl.ds(q_start, tq), :]                        # (tq, E) f32
    q_tile = q_s[pl.ds(q_start, tq), :]                             # (tq, E) bf16
    mask = mask_ref[0, 0]                                           # (tq, S) f32

    # Static head loop keeps per-head lane offsets static so the merged
    # attention is built lane-dense in registers (one concatenate, one store).
    head_outs = []
    for h in range(num_head):
        lo = h * dim_head
        qh = q_tile[:, lo:lo + dim_head]
        kh = k_s[:, lo:lo + dim_head]
        vh = v_s[:, lo:lo + dim_head]

        # q @ k^T without materializing a transpose (contract on dim_head).
        s = jax.lax.dot_general(qh, kh, (((1,), (1,)), ((), ())),
                                preferred_element_type=jnp.float32)  # (tq, S)
        s = s + mask

        # exact softmax in f32 (the probabilities are a kernel output).
        s = s - jnp.max(s, axis=-1, keepdims=True)
        e = jnp.exp(s)
        p = e / jnp.sum(e, axis=-1, keepdims=True)
        scores_ref[0, h] = p.astype(scores_ref.dtype)               # lane-dense

        head_outs.append(jnp.dot(p.astype(jnp.bfloat16), vh,
                                 preferred_element_type=jnp.float32))

    merged = jnp.concatenate(head_outs, axis=-1)                    # (tq, E) f32
    attn_ref[0] = merged.astype(attn_ref.dtype)                     # one full-width store

    # ---- out_proj + residual(f32 x) + LayerNorm1 (two-pass variance) -------
    a = jnp.dot(merged.astype(jnp.bfloat16), wo_ref[...],
                preferred_element_type=jnp.float32) + bo_ref[0]
    h1 = x_tile + a
    mu = jnp.mean(h1, axis=-1, keepdims=True)
    xc = h1 - mu
    var = jnp.mean(xc * xc, axis=-1, keepdims=True)
    h1 = xc * jax.lax.rsqrt(var + eps) * g1_ref[0] + be1_ref[0]

    # ---- FFN: linear1 -> ReLU -> linear2, + residual + LayerNorm2 ----------
    f = jnp.dot(h1.astype(jnp.bfloat16), w1_ref[...],
                preferred_element_type=jnp.float32) + b1_ref[0]
    f = jnp.maximum(f, 0.0)
    f = jnp.dot(f.astype(jnp.bfloat16), w2_ref[...],
                preferred_element_type=jnp.float32) + b2_ref[0]
    y = h1 + f
    mu2 = jnp.mean(y, axis=-1, keepdims=True)
    yc = y - mu2
    var2 = jnp.mean(yc * yc, axis=-1, keepdims=True)
    y = yc * jax.lax.rsqrt(var2 + eps) * g2_ref[0] + be2_ref[0]
    y_ref[0] = y.astype(y_ref.dtype)


# ----------------------------------------------------------------------------
# Wrapper.
# ----------------------------------------------------------------------------
def mixcoder_decoder_layer(x, attention_mask, params, *, num_head, dim_head,
                           eps=1e-5, tq=None, scores_dtype=jnp.float32):
    B, S, E = x.shape
    assert E == num_head * dim_head
    if tq is None:
        tq = S if S <= 256 else 256
    assert S % tq == 0 and (tq % 8 == 0 or tq == S)
    num_q_tiles = S // tq

    # Reference computes scores / dim_head**-0.5 == scores * sqrt(dim_head);
    # fold that scale into the Q weights/bias (bit-exact for pow-2 dim_head).
    inv_scaling = float(dim_head) ** 0.5
    wqkv = jnp.concatenate(
        [params["wq"] * inv_scaling, params["wk"], params["wv"]],
        axis=1).astype(jnp.bfloat16)
    bqkv = jnp.concatenate(
        [params["bq"] * inv_scaling, params["bk"], params["bv"]],
        axis=1).astype(jnp.float32)
    wo = params["wo"].astype(jnp.bfloat16)
    w1 = params["w1"].astype(jnp.bfloat16)
    w2 = params["w2"].astype(jnp.bfloat16)
    x_f32 = x.astype(jnp.float32)
    mask = attention_mask.astype(jnp.float32)

    # Support both broadcast (1,1,S,S) and per-batch (B,1,S,S) masks.
    if mask.shape[0] == B:
        mask_map = lambda b, qi: (b, 0, qi, 0)
    else:
        mask_map = lambda b, qi: (0, 0, qi, 0)

    # Constant across the grid -> single-buffered (no 2x VMEM for weights).
    def const_spec(shape):
        return pl.BlockSpec(shape, lambda b, qi: (0,) * len(shape),
                            pipeline_mode=pl.Buffered(1))

    kernel = functools.partial(_decoder_layer_kernel, num_head=num_head,
                               dim_head=dim_head, tq=tq, eps=eps)

    flops = int(B * (2 * S * E * 3 * E                  # fused QKV projection
                     + 4 * S * S * E                    # QK^T and P@V (all heads)
                     + 3 * 2 * S * E * E))              # out_proj, linear1, linear2
    transcendentals = int(B * num_head * S * S)
    scores_bytes = jnp.dtype(scores_dtype).itemsize
    bytes_accessed = int(
        B * S * E * 4                                   # x (f32)
        + mask.size * 4
        + (wqkv.size + wo.size + w1.size + w2.size) * 2
        + (bqkv.size + params["bo"].size + params["b1"].size
           + params["b2"].size + 4 * E) * 4
        + 2 * B * S * E * 4                             # y + merged attention
        + B * num_head * S * S * scores_bytes)          # scores

    # VMEM budget: single-buffered weights, double-buffered activation blocks,
    # bf16 q/k/v scratch. Generous headroom, capped at v7x physical (64 MiB).
    vmem_est = (
        (wqkv.size + wo.size + w1.size + w2.size) * 2
        + (bqkv.size + params["bo"].size + params["b1"].size
           + params["b2"].size + 4 * E) * 4
        + 2 * S * E * 4                                 # x block
        + 2 * tq * S * 4                                # mask block
        + 3 * S * E * 2                                 # q/k/v scratch
        + 2 * 2 * tq * E * 4                            # y + attn blocks
        + 2 * num_head * tq * S * scores_bytes)         # scores block
    vmem_limit = int(min(max(2 * vmem_est + (4 << 20), 16 << 20), 64 << 20))

    y, attn_merged, scores = pl.pallas_call(
        kernel,
        out_shape=(
            jax.ShapeDtypeStruct((B, S, E), jnp.float32),             # y
            jax.ShapeDtypeStruct((B, S, E), jnp.float32),             # attn (merged)
            jax.ShapeDtypeStruct((B, num_head, S, S), scores_dtype),  # scores
        ),
        grid_spec=pltpu.PrefetchScalarGridSpec(
            num_scalar_prefetch=0,
            grid=(B, num_q_tiles),
            in_specs=[
                pl.BlockSpec((1, S, E), lambda b, qi: (b, 0, 0)),     # x (full per b)
                pl.BlockSpec((1, 1, tq, S), mask_map),                # mask q-tile
                const_spec((E, 3 * E)), const_spec((1, 3 * E)),       # qkv proj
                const_spec((E, E)), const_spec((1, E)),               # out_proj
                const_spec((E, E)), const_spec((1, E)),               # linear1
                const_spec((E, E)), const_spec((1, E)),               # linear2
                const_spec((1, E)), const_spec((1, E)),               # norm1
                const_spec((1, E)), const_spec((1, E)),               # norm2
            ],
            out_specs=[
                pl.BlockSpec((1, tq, E), lambda b, qi: (b, qi, 0)),
                pl.BlockSpec((1, tq, E), lambda b, qi: (b, qi, 0)),
                pl.BlockSpec((1, num_head, tq, S), lambda b, qi: (b, 0, qi, 0)),
            ],
            scratch_shapes=[pltpu.VMEM((S, E), jnp.bfloat16)] * 3,    # q, k, v
        ),
        compiler_params=pltpu.CompilerParams(
            # qi carries the q/k/v scratch written at qi == 0 -> "arbitrary".
            dimension_semantics=("parallel", "arbitrary"),
            vmem_limit_bytes=vmem_limit),
        cost_estimate=pl.CostEstimate(flops=flops,
                                      transcendentals=transcendentals,
                                      bytes_accessed=bytes_accessed),
    )(x_f32, mask, wqkv, bqkv, wo, params["bo"], w1, params["b1"],
      w2, params["b2"], params["g1"], params["be1"], params["g2"], params["be2"])

    # Merged (B, S, E) attention is returned lane-dense; a (B, H, S, D) view
    # is a cheap reshape/transpose for any consumer that needs it.
    return y, attn_merged, scores


# ----------------------------------------------------------------------------
# Deterministic parameters and a pure-JAX reference for validation.
# ----------------------------------------------------------------------------
def init_params(key, num_head, dim_head):
    E = num_head * dim_head
    ks = jax.random.split(key, 6)
    scale = 0.05

    def lin(k):
        w = scale * jax.random.normal(k, (E, E), jnp.float32)   # x @ W convention
        b = scale * jax.random.normal(jax.random.fold_in(k, 1), (1, E), jnp.float32)
        return w, b

    wq, bq = lin(ks[0]); wk, bk = lin(ks[1]); wv, bv = lin(ks[2])
    wo, bo = lin(ks[3]); w1, b1 = lin(ks[4]); w2, b2 = lin(ks[5])
    return dict(wq=wq, bq=bq, wk=wk, bk=bk, wv=wv, bv=bv, wo=wo, bo=bo,
                w1=w1, b1=b1, w2=w2, b2=b2,
                g1=jnp.ones((1, E), jnp.float32), be1=jnp.zeros((1, E), jnp.float32),
                g2=jnp.ones((1, E), jnp.float32), be2=jnp.zeros((1, E), jnp.float32))


def _reference(x, mask, p, num_head, dim_head, eps=1e-5):
    B, S, E = x.shape
    q = x @ p["wq"] + p["bq"][0]
    k = x @ p["wk"] + p["bk"][0]
    v = x @ p["wv"] + p["bv"][0]
    split = lambda t: t.reshape(B, S, num_head, dim_head).transpose(0, 2, 1, 3)
    q, k, v = split(q), split(k), split(v)
    scaling = dim_head ** (-0.5)
    s = jnp.einsum("bhqd,bhkd->bhqk", q, k) / scaling + mask
    pr = jax.nn.softmax(s, axis=-1)
    o = jnp.einsum("bhqk,bhkd->bhqd", pr, v)
    merged = o.transpose(0, 2, 1, 3).reshape(B, S, E)

    def ln(t, g, b):
        mu = t.mean(-1, keepdims=True)
        var = ((t - mu) ** 2).mean(-1, keepdims=True)
        return (t - mu) / jnp.sqrt(var + eps) * g[0] + b[0]

    h = ln(x + merged @ p["wo"] + p["bo"][0], p["g1"], p["be1"])
    f = jnp.maximum(h @ p["w1"] + p["b1"][0], 0.0) @ p["w2"] + p["b2"][0]
    y = ln(h + f, p["g2"], p["be2"])
    return y, merged, pr


if __name__ == "__main__":
    NUM_HEAD, DIM_HEAD = 2, 16           # hidden_size = 32
    B, S, TQ = 2, 16, 8                  # two query tiles -> exercises scratch reuse
    E = NUM_HEAD * DIM_HEAD

    key = jax.random.PRNGKey(0)
    kx, kp = jax.random.split(key)
    x = jax.random.normal(kx, (B, S, E), jnp.float32)

    causal = jnp.tril(jnp.ones((S, S), jnp.float32))
    attention_mask = jnp.where(causal == 1.0, 0.0, -1e9)[None, None]   # (1,1,S,S)

    params = init_params(kp, NUM_HEAD, DIM_HEAD)

    y, attn_merged, attn_scores = mixcoder_decoder_layer(
        x, attention_mask, params, num_head=NUM_HEAD, dim_head=DIM_HEAD, tq=TQ)
    jax.block_until_ready((y, attn_merged, attn_scores))

    assert y.shape == (B, S, E)
    assert attn_merged.shape == (B, S, E)
    assert attn_scores.shape == (B, NUM_HEAD, S, S)

    # Validate against a pure-JAX f32 reference (bf16 MXU operands in-kernel).
    y_ref, attn_ref, scores_ref = _reference(x, attention_mask, params,
                                             NUM_HEAD, DIM_HEAD)
    assert bool(jnp.all(jnp.isfinite(y)))
    assert bool(jnp.allclose(attn_scores, scores_ref, atol=5e-2, rtol=5e-2))
    assert bool(jnp.allclose(attn_merged, attn_ref, atol=5e-2, rtol=5e-2))
    assert bool(jnp.allclose(y, y_ref, atol=5e-2, rtol=5e-2))

    print("KERNEL_OK")
</pallas_src>

<mosaic_0001>
module attributes {stable_mosaic.version = 11 : i64} {
  func.func @_decoder_layer_kernel(%arg0: i32, %arg1: i32, %arg2: memref<1x16x32xf32, #tpu.memory_space<vmem>>, %arg3: memref<1x1x8x16xf32, #tpu.memory_space<vmem>>, %arg4: memref<32x96xbf16, #tpu.memory_space<vmem>>, %arg5: memref<1x96xf32, #tpu.memory_space<vmem>>, %arg6: memref<32x32xbf16, #tpu.memory_space<vmem>>, %arg7: memref<1x32xf32, #tpu.memory_space<vmem>>, %arg8: memref<32x32xbf16, #tpu.memory_space<vmem>>, %arg9: memref<1x32xf32, #tpu.memory_space<vmem>>, %arg10: memref<32x32xbf16, #tpu.memory_space<vmem>>, %arg11: memref<1x32xf32, #tpu.memory_space<vmem>>, %arg12: memref<1x32xf32, #tpu.memory_space<vmem>>, %arg13: memref<1x32xf32, #tpu.memory_space<vmem>>, %arg14: memref<1x32xf32, #tpu.memory_space<vmem>>, %arg15: memref<1x32xf32, #tpu.memory_space<vmem>>, %arg16: memref<1x8x32xf32, #tpu.memory_space<vmem>>, %arg17: memref<1x8x32xf32, #tpu.memory_space<vmem>>, %arg18: memref<1x2x8x16xf32, #tpu.memory_space<vmem>>, %arg19: memref<16x32xbf16, #tpu.memory_space<vmem>>, %arg20: memref<16x32xbf16, #tpu.memory_space<vmem>>, %arg21: memref<16x32xbf16, #tpu.memory_space<vmem>>) attributes {dimension_semantics = [#tpu.dimension_semantics<parallel>, #tpu.dimension_semantics<arbitrary>], iteration_bounds = array<i64: 2, 2>, scalar_prefetch = 0 : i64, scratch_operands = 3 : i64, tpu.core_type = #tpu.core_type<tc>, window_params = [{transform_indices = @transform_0, window_bounds = array<i64: 1, 16, 32>}, {transform_indices = @transform_1, window_bounds = array<i64: 1, 1, 8, 16>}, {pipeline_mode = #tpu.pipeline_mode<synchronous>, transform_indices = @transform_2, window_bounds = array<i64: 32, 96>}, {pipeline_mode = #tpu.pipeline_mode<synchronous>, transform_indices = @transform_3, window_bounds = array<i64: 1, 96>}, {pipeline_mode = #tpu.pipeline_mode<synchronous>, transform_indices = @transform_4, window_bounds = array<i64: 32, 32>}, {pipeline_mode = #tpu.pipeline_mode<synchronous>, transform_indices = @transform_5, window_bounds = array<i64: 1, 32>}, {pipeline_mode = #tpu.pipeline_mode<synchronous>, transform_indices = @transform_6, window_bounds = array<i64: 32, 32>}, {pipeline_mode = #tpu.pipeline_mode<synchronous>, transform_indices = @transform_7, window_bounds = array<i64: 1, 32>}, {pipeline_mode = #tpu.pipeline_mode<synchronous>, transform_indices = @transform_8, window_bounds = array<i64: 32, 32>}, {pipeline_mode = #tpu.pipeline_mode<synchronous>, transform_indices = @transform_9, window_bounds = array<i64: 1, 32>}, {pipeline_mode = #tpu.pipeline_mode<synchronous>, transform_indices = @transform_10, window_bounds = array<i64: 1, 32>}, {pipeline_mode = #tpu.pipeline_mode<synchronous>, transform_indices = @transform_11, window_bounds = array<i64: 1, 32>}, {pipeline_mode = #tpu.pipeline_mode<synchronous>, transform_indices = @transform_12, window_bounds = array<i64: 1, 32>}, {pipeline_mode = #tpu.pipeline_mode<synchronous>, transform_indices = @transform_13, window_bounds = array<i64: 1, 32>}, {transform_indices = @transform_14, window_bounds = array<i64: 1, 8, 32>}, {transform_indices = @transform_15, window_bounds = array<i64: 1, 8, 32>}, {transform_indices = @transform_16, window_bounds = array<i64: 1, 2, 8, 16>}]} {
    %c0_i32 = arith.constant 0 : i32
    %0 = arith.cmpi eq, %arg1, %c0_i32 : i32
    %1 = arith.extui %0 : i1 to i32
    %c0_i32_0 = arith.constant 0 : i32
    %2 = arith.cmpi ne, %1, %c0_i32_0 : i32
    scf.if %2 {
      %c0_68 = arith.constant 0 : index
      %c0_69 = arith.constant 0 : index
      %c0_70 = arith.constant 0 : index
      %137 = vector.load %arg2[%c0_68, %c0_69, %c0_70] : memref<1x16x32xf32, #tpu.memory_space<vmem>>, vector<1x16x32xf32>
      %138 = vector.shape_cast %137 : vector<1x16x32xf32> to vector<16x32xf32>
      %139 = arith.truncf %138 : vector<16x32xf32> to vector<16x32xbf16>
      %c0_71 = arith.constant 0 : index
      %c0_72 = arith.constant 0 : index
      %140 = vector.load %arg4[%c0_71, %c0_72] : memref<32x96xbf16, #tpu.memory_space<vmem>>, vector<32x96xbf16>
      %cst_73 = arith.constant dense<0.000000e+00> : vector<16x96xf32>
      %141 = tpu.matmul %139, %140, %cst_73 {dimension_numbers = #tpu.dot_dimension_numbers<[1], [0], [0], [1], [0, 0, 1, 1], [], []>} : vector<16x32xbf16>, vector<32x96xbf16>, vector<16x96xf32> -> vector<16x96xf32>
      %c0_74 = arith.constant 0 : index
      %c0_75 = arith.constant 0 : index
      %142 = vector.load %arg5[%c0_74, %c0_75] : memref<1x96xf32, #tpu.memory_space<vmem>>, vector<1x96xf32>
      %143 = vector.shape_cast %142 : vector<1x96xf32> to vector<96xf32>
      %144 = vector.shape_cast %143 : vector<96xf32> to vector<1x96xf32>
      %145 = vector.broadcast %144 : vector<1x96xf32> to vector<16x96xf32>
      %146 = arith.addf %141, %145 : vector<16x96xf32>
      %147 = arith.truncf %146 : vector<16x96xf32> to vector<16x96xbf16>
      %148 = vector.extract_strided_slice %147 {offsets = [0, 0], sizes = [16, 32], strides = [1, 1]} : vector<16x96xbf16> to vector<16x32xbf16>
      %c0_76 = arith.constant 0 : index
      %c0_77 = arith.constant 0 : index
      %149 = vector.load %arg19[%c0_76, %c0_77] : memref<16x32xbf16, #tpu.memory_space<vmem>>, vector<16x32xbf16>
      tpu.vector_store %arg19[%c0_76, %c0_77], %148 {strides = array<i32>} : memref<16x32xbf16, #tpu.memory_space<vmem>>, vector<16x32xbf16>,
      %150 = vector.extract_strided_slice %147 {offsets = [0, 32], sizes = [16, 32], strides = [1, 1]} : vector<16x96xbf16> to vector<16x32xbf16>
      %c0_78 = arith.constant 0 : index
      %c0_79 = arith.constant 0 : index
      %151 = vector.load %arg20[%c0_78, %c0_79] : memref<16x32xbf16, #tpu.memory_space<vmem>>, vector<16x32xbf16>
      tpu.vector_store %arg20[%c0_78, %c0_79], %150 {strides = array<i32>} : memref<16x32xbf16, #tpu.memory_space<vmem>>, vector<16x32xbf16>,
      %152 = vector.extract_strided_slice %147 {offsets = [0, 64], sizes = [16, 32], strides = [1, 1]} : vector<16x96xbf16> to vector<16x32xbf16>
      %c0_80 = arith.constant 0 : index
      %c0_81 = arith.constant 0 : index
      %153 = vector.load %arg21[%c0_80, %c0_81] : memref<16x32xbf16, #tpu.memory_space<vmem>>, vector<16x32xbf16>
      tpu.vector_store %arg21[%c0_80, %c0_81], %152 {strides = array<i32>} : memref<16x32xbf16, #tpu.memory_space<vmem>>, vector<16x32xbf16>,
    } else {
    }
    %c8_i32 = arith.constant 8 : i32
    %3 = arith.muli %arg1, %c8_i32 : i32
    %4 = tpu.assume_multiple %3, 8 : i32
    %c0 = arith.constant 0 : index
    %5 = arith.index_cast %4 : i32 to index
    %c0_1 = arith.constant 0 : index
    %6 = vector.load %arg2[%c0, %5, %c0_1] : memref<1x16x32xf32, #tpu.memory_space<vmem>>, vector<1x8x32xf32>
    %7 = vector.shape_cast %6 : vector<1x8x32xf32> to vector<8x32xf32>
    %8 = arith.index_cast %4 : i32 to index
    %c0_2 = arith.constant 0 : index
    %9 = vector.load %arg19[%8, %c0_2] : memref<16x32xbf16, #tpu.memory_space<vmem>>, vector<8x32xbf16>
    %c0_3 = arith.constant 0 : index
    %c0_4 = arith.constant 0 : index
    %c0_5 = arith.constant 0 : index
    %c0_6 = arith.constant 0 : index
    %10 = vector.load %arg3[%c0_3, %c0_4, %c0_5, %c0_6] : memref<1x1x8x16xf32, #tpu.memory_space<vmem>>, vector<1x1x8x16xf32>
    %11 = vector.shape_cast %10 : vector<1x1x8x16xf32> to vector<8x16xf32>
    %12 = vector.extract_strided_slice %9 {offsets = [0, 0], sizes = [8, 16], strides = [1, 1]} : vector<8x32xbf16> to vector<8x16xbf16>
    %c0_7 = arith.constant 0 : index
    %c0_8 = arith.constant 0 : index
    %13 = vector.load %arg20[%c0_7, %c0_8] : memref<16x32xbf16, #tpu.memory_space<vmem>>, vector<16x16xbf16>
    %c0_9 = arith.constant 0 : index
    %c0_10 = arith.constant 0 : index
    %14 = vector.load %arg21[%c0_9, %c0_10] : memref<16x32xbf16, #tpu.memory_space<vmem>>, vector<16x16xbf16>
    %cst = arith.constant dense<0.000000e+00> : vector<8x16xf32>
    %15 = tpu.matmul %12, %13, %cst {dimension_numbers = #tpu.dot_dimension_numbers<[1], [1], [0], [0], [0, 0, 1, 0], [], []>} : vector<8x16xbf16>, vector<16x16xbf16>, vector<8x16xf32> -> vector<8x16xf32>
    %16 = arith.addf %15, %11 : vector<8x16xf32>
    %cst_11 = arith.constant dense<0xFF800000> : vector<8xf32>
    %17 = vector.multi_reduction <maximumf>, %16, %cst_11 [1] : vector<8x16xf32> to vector<8xf32>
    %18 = vector.shape_cast %17 : vector<8xf32> to vector<8x1xf32>
    %19 = vector.broadcast %18 : vector<8x1xf32> to vector<8x16xf32>
    %20 = arith.subf %16, %19 : vector<8x16xf32>
    %21 = math.exp %20 : vector<8x16xf32>
    %cst_12 = arith.constant dense<0.000000e+00> : vector<8xf32>
    %22 = vector.multi_reduction <add>, %21, %cst_12 [1] : vector<8x16xf32> to vector<8xf32>
    %23 = vector.shape_cast %22 : vector<8xf32> to vector<8x1xf32>
    %24 = vector.broadcast %23 : vector<8x1xf32> to vector<8x16xf32>
    %25 = arith.divf %21, %24 : vector<8x16xf32>
    %c0_13 = arith.constant 0 : index
    %c0_14 = arith.constant 0 : index
    %c0_15 = arith.constant 0 : index
    %c0_16 = arith.constant 0 : index
    %26 = vector.load %arg18[%c0_13, %c0_14, %c0_15, %c0_16] : memref<1x2x8x16xf32, #tpu.memory_space<vmem>>, vector<1x1x8x16xf32>
    %27 = vector.shape_cast %26 : vector<1x1x8x16xf32> to vector<8x16xf32>
    %28 = vector.shape_cast %25 : vector<8x16xf32> to vector<1x1x8x16xf32>
    tpu.vector_store %arg18[%c0_13, %c0_14, %c0_15, %c0_16], %28 {strides = array<i32>} : memref<1x2x8x16xf32, #tpu.memory_space<vmem>>, vector<1x1x8x16xf32>,
    %29 = arith.truncf %25 : vector<8x16xf32> to vector<8x16xbf16>
    %cst_17 = arith.constant dense<0.000000e+00> : vector<8x16xf32>
    %30 = tpu.matmul %29, %14, %cst_17 {dimension_numbers = #tpu.dot_dimension_numbers<[1], [0], [0], [1], [0, 0, 1, 1], [], []>} : vector<8x16xbf16>, vector<16x16xbf16>, vector<8x16xf32> -> vector<8x16xf32>
    %31 = vector.extract_strided_slice %9 {offsets = [0, 16], sizes = [8, 16], strides = [1, 1]} : vector<8x32xbf16> to vector<8x16xbf16>
    %c0_18 = arith.constant 0 : index
    %c16 = arith.constant 16 : index
    %32 = vector.load %arg20[%c0_18, %c16] : memref<16x32xbf16, #tpu.memory_space<vmem>>, vector<16x16xbf16>
    %c0_19 = arith.constant 0 : index
    %c16_20 = arith.constant 16 : index
    %33 = vector.load %arg21[%c0_19, %c16_20] : memref<16x32xbf16, #tpu.memory_space<vmem>>, vector<16x16xbf16>
    %cst_21 = arith.constant dense<0.000000e+00> : vector<8x16xf32>
    %34 = tpu.matmul %31, %32, %cst_21 {dimension_numbers = #tpu.dot_dimension_numbers<[1], [1], [0], [0], [0, 0, 1, 0], [], []>} : vector<8x16xbf16>, vector<16x16xbf16>, vector<8x16xf32> -> vector<8x16xf32>
    %35 = arith.addf %34, %11 : vector<8x16xf32>
    %cst_22 = arith.constant dense<0xFF800000> : vector<8xf32>
    %36 = vector.multi_reduction <maximumf>, %35, %cst_22 [1] : vector<8x16xf32> to vector<8xf32>
    %37 = vector.shape_cast %36 : vector<8xf32> to vector<8x1xf32>
    %38 = vector.broadcast %37 : vector<8x1xf32> to vector<8x16xf32>
    %39 = arith.subf %35, %38 : vector<8x16xf32>
    %40 = math.exp %39 : vector<8x16xf32>
    %cst_23 = arith.constant dense<0.000000e+00> : vector<8xf32>
    %41 = vector.multi_reduction <add>, %40, %cst_23 [1] : vector<8x16xf32> to vector<8xf32>
    %42 = vector.shape_cast %41 : vector<8xf32> to vector<8x1xf32>
    %43 = vector.broadcast %42 : vector<8x1xf32> to vector<8x16xf32>
    %44 = arith.divf %40, %43 : vector<8x16xf32>
    %c0_24 = arith.constant 0 : index
    %c1 = arith.constant 1 : index
    %c0_25 = arith.constant 0 : index
    %c0_26 = arith.constant 0 : index
    %45 = vector.load %arg18[%c0_24, %c1, %c0_25, %c0_26] : memref<1x2x8x16xf32, #tpu.memory_space<vmem>>, vector<1x1x8x16xf32>
    %46 = vector.shape_cast %45 : vector<1x1x8x16xf32> to vector<8x16xf32>
    %47 = vector.shape_cast %44 : vector<8x16xf32> to vector<1x1x8x16xf32>
    tpu.vector_store %arg18[%c0_24, %c1, %c0_25, %c0_26], %47 {strides = array<i32>} : memref<1x2x8x16xf32, #tpu.memory_space<vmem>>, vector<1x1x8x16xf32>,
    %48 = arith.truncf %44 : vector<8x16xf32> to vector<8x16xbf16>
    %cst_27 = arith.constant dense<0.000000e+00> : vector<8x16xf32>
    %49 = tpu.matmul %48, %33, %cst_27 {dimension_numbers = #tpu.dot_dimension_numbers<[1], [0], [0], [1], [0, 0, 1, 1], [], []>} : vector<8x16xbf16>, vector<16x16xbf16>, vector<8x16xf32> -> vector<8x16xf32>
    %50 = tpu.concatenate %30, %49 in 1 : vector<8x16xf32>, vector<8x16xf32> -> vector<8x32xf32>
    %c0_28 = arith.constant 0 : index
    %c0_29 = arith.constant 0 : index
    %c0_30 = arith.constant 0 : index
    %51 = vector.load %arg17[%c0_28, %c0_29, %c0_30] : memref<1x8x32xf32, #tpu.memory_space<vmem>>, vector<1x8x32xf32>
    %52 = vector.shape_cast %51 : vector<1x8x32xf32> to vector<8x32xf32>
    %53 = vector.shape_cast %50 : vector<8x32xf32> to vector<1x8x32xf32>
    tpu.vector_store %arg17[%c0_28, %c0_29, %c0_30], %53 {strides = array<i32>} : memref<1x8x32xf32, #tpu.memory_space<vmem>>, vector<1x8x32xf32>,
    %54 = arith.truncf %50 : vector<8x32xf32> to vector<8x32xbf16>
    %c0_31 = arith.constant 0 : index
    %c0_32 = arith.constant 0 : index
    %55 = vector.load %arg6[%c0_31, %c0_32] : memref<32x32xbf16, #tpu.memory_space<vmem>>, vector<32x32xbf16>
    %cst_33 = arith.constant dense<0.000000e+00> : vector<8x32xf32>
    %56 = tpu.matmul %54, %55, %cst_33 {dimension_numbers = #tpu.dot_dimension_numbers<[1], [0], [0], [1], [0, 0, 1, 1], [], []>} : vector<8x32xbf16>, vector<32x32xbf16>, vector<8x32xf32> -> vector<8x32xf32>
    %c0_34 = arith.constant 0 : index
    %c0_35 = arith.constant 0 : index
    %57 = vector.load %arg7[%c0_34, %c0_35] : memref<1x32xf32, #tpu.memory_space<vmem>>, vector<1x32xf32>
    %58 = vector.shape_cast %57 : vector<1x32xf32> to vector<32xf32>
    %59 = vector.shape_cast %58 : vector<32xf32> to vector<1x32xf32>
    %60 = vector.broadcast %59 : vector<1x32xf32> to vector<8x32xf32>
    %61 = arith.addf %56, %60 : vector<8x32xf32>
    %62 = arith.addf %7, %61 : vector<8x32xf32>
    %cst_36 = arith.constant dense<0.000000e+00> : vector<8xf32>
    %63 = vector.multi_reduction <add>, %62, %cst_36 [1] : vector<8x32xf32> to vector<8xf32>
    %64 = vector.shape_cast %63 : vector<8xf32> to vector<8x1xf32>
    %cst_37 = arith.constant 3.200000e+01 : f32
    %65 = vector.broadcast %cst_37 : f32 to vector<8x1xf32>
    %66 = arith.divf %64, %65 : vector<8x1xf32>
    %67 = vector.broadcast %66 : vector<8x1xf32> to vector<8x32xf32>
    %68 = arith.subf %62, %67 : vector<8x32xf32>
    %69 = arith.mulf %68, %68 : vector<8x32xf32>
    %cst_38 = arith.constant dense<0.000000e+00> : vector<8xf32>
    %70 = vector.multi_reduction <add>, %69, %cst_38 [1] : vector<8x32xf32> to vector<8xf32>
    %71 = vector.shape_cast %70 : vector<8xf32> to vector<8x1xf32>
    %cst_39 = arith.constant 3.200000e+01 : f32
    %72 = vector.broadcast %cst_39 : f32 to vector<8x1xf32>
    %73 = arith.divf %71, %72 : vector<8x1xf32>
    %cst_40 = arith.constant 9.99999974E-6 : f32
    %74 = vector.broadcast %cst_40 : f32 to vector<8x1xf32>
    %75 = arith.addf %73, %74 : vector<8x1xf32>
    %76 = math.rsqrt %75 : vector<8x1xf32>
    %77 = vector.broadcast %76 : vector<8x1xf32> to vector<8x32xf32>
    %78 = arith.mulf %68, %77 : vector<8x32xf32>
    %c0_41 = arith.constant 0 : index
    %c0_42 = arith.constant 0 : index
    %79 = vector.load %arg12[%c0_41, %c0_42] : memref<1x32xf32, #tpu.memory_space<vmem>>, vector<1x32xf32>
    %80 = vector.shape_cast %79 : vector<1x32xf32> to vector<32xf32>
    %81 = vector.shape_cast %80 : vector<32xf32> to vector<1x32xf32>
    %82 = vector.broadcast %81 : vector<1x32xf32> to vector<8x32xf32>
    %83 = arith.mulf %78, %82 : vector<8x32xf32>
    %c0_43 = arith.constant 0 : index
    %c0_44 = arith.constant 0 : index
    %84 = vector.load %arg13[%c0_43, %c0_44] : memref<1x32xf32, #tpu.memory_space<vmem>>, vector<1x32xf32>
    %85 = vector.shape_cast %84 : vector<1x32xf32> to vector<32xf32>
    %86 = vector.shape_cast %85 : vector<32xf32> to vector<1x32xf32>
    %87 = vector.broadcast %86 : vector<1x32xf32> to vector<8x32xf32>
    %88 = arith.addf %83, %87 : vector<8x32xf32>
    %89 = arith.truncf %88 : vector<8x32xf32> to vector<8x32xbf16>
    %c0_45 = arith.constant 0 : index
    %c0_46 = arith.constant 0 : index
    %90 = vector.load %arg8[%c0_45, %c0_46] : memref<32x32xbf16, #tpu.memory_space<vmem>>, vector<32x32xbf16>
    %cst_47 = arith.constant dense<0.000000e+00> : vector<8x32xf32>
    %91 = tpu.matmul %89, %90, %cst_47 {dimension_numbers = #tpu.dot_dimension_numbers<[1], [0], [0], [1], [0, 0, 1, 1], [], []>} : vector<8x32xbf16>, vector<32x32xbf16>, vector<8x32xf32> -> vector<8x32xf32>
    %c0_48 = arith.constant 0 : index
    %c0_49 = arith.constant 0 : index
    %92 = vector.load %arg9[%c0_48, %c0_49] : memref<1x32xf32, #tpu.memory_space<vmem>>, vector<1x32xf32>
    %93 = vector.shape_cast %92 : vector<1x32xf32> to vector<32xf32>
    %94 = vector.shape_cast %93 : vector<32xf32> to vector<1x32xf32>
    %95 = vector.broadcast %94 : vector<1x32xf32> to vector<8x32xf32>
    %96 = arith.addf %91, %95 : vector<8x32xf32>
    %cst_50 = arith.constant 0.000000e+00 : f32
    %97 = vector.broadcast %cst_50 : f32 to vector<8x32xf32>
    %98 = arith.maximumf %96, %97 : vector<8x32xf32>
    %99 = arith.truncf %98 : vector<8x32xf32> to vector<8x32xbf16>
    %c0_51 = arith.constant 0 : index
    %c0_52 = arith.constant 0 : index
    %100 = vector.load %arg10[%c0_51, %c0_52] : memref<32x32xbf16, #tpu.memory_space<vmem>>, vector<32x32xbf16>
    %cst_53 = arith.constant dense<0.000000e+00> : vector<8x32xf32>
    %101 = tpu.matmul %99, %100, %cst_53 {dimension_numbers = #tpu.dot_dimension_numbers<[1], [0], [0], [1], [0, 0, 1, 1], [], []>} : vector<8x32xbf16>, vector<32x32xbf16>, vector<8x32xf32> -> vector<8x32xf32>
    %c0_54 = arith.constant 0 : index
    %c0_55 = arith.constant 0 : index
    %102 = vector.load %arg11[%c0_54, %c0_55] : memref<1x32xf32, #tpu.memory_space<vmem>>, vector<1x32xf32>
    %103 = vector.shape_cast %102 : vector<1x32xf32> to vector<32xf32>
    %104 = vector.shape_cast %103 : vector<32xf32> to vector<1x32xf32>
    %105 = vector.broadcast %104 : vector<1x32xf32> to vector<8x32xf32>
    %106 = arith.addf %101, %105 : vector<8x32xf32>
    %107 = arith.addf %88, %106 : vector<8x32xf32>
    %cst_56 = arith.constant dense<0.000000e+00> : vector<8xf32>
    %108 = vector.multi_reduction <add>, %107, %cst_56 [1] : vector<8x32xf32> to vector<8xf32>
    %109 = vector.shape_cast %108 : vector<8xf32> to vector<8x1xf32>
    %cst_57 = arith.constant 3.200000e+01 : f32
    %110 = vector.broadcast %cst_57 : f32 to vector<8x1xf32>
    %111 = arith.divf %109, %110 : vector<8x1xf32>
    %112 = vector.broadcast %111 : vector<8x1xf32> to vector<8x32xf32>
    %113 = arith.subf %107, %112 : vector<8x32xf32>
    %114 = arith.mulf %113, %113 : vector<8x32xf32>
    %cst_58 = arith.constant dense<0.000000e+00> : vector<8xf32>
    %115 = vector.multi_reduction <add>, %114, %cst_58 [1] : vector<8x32xf32> to vector<8xf32>
    %116 = vector.shape_cast %115 : vector<8xf32> to vector<8x1xf32>
    %cst_59 = arith.constant 3.200000e+01 : f32
    %117 = vector.broadcast %cst_59 : f32 to vector<8x1xf32>
    %118 = arith.divf %116, %117 : vector<8x1xf32>
    %cst_60 = arith.constant 9.99999974E-6 : f32
    %119 = vector.broadcast %cst_60 : f32 to vector<8x1xf32>
    %120 = arith.addf %118, %119 : vector<8x1xf32>
    %121 = math.rsqrt %120 : vector<8x1xf32>
    %122 = vector.broadcast %121 : vector<8x1xf32> to vector<8x32xf32>
    %123 = arith.mulf %113, %122 : vector<8x32xf32>
    %c0_61 = arith.constant 0 : index
    %c0_62 = arith.constant 0 : index
    %124 = vector.load %arg14[%c0_61, %c0_62] : memref<1x32xf32, #tpu.memory_space<vmem>>, vector<1x32xf32>
    %125 = vector.shape_cast %124 : vector<1x32xf32> to vector<32xf32>
    %126 = vector.shape_cast %125 : vector<32xf32> to vector<1x32xf32>
    %127 = vector.broadcast %126 : vector<1x32xf32> to vector<8x32xf32>
    %128 = arith.mulf %123, %127 : vector<8x32xf32>
    %c0_63 = arith.constant 0 : index
    %c0_64 = arith.constant 0 : index
    %129 = vector.load %arg15[%c0_63, %c0_64] : memref<1x32xf32, #tpu.memory_space<vmem>>, vector<1x32xf32>
    %130 = vector.shape_cast %129 : vector<1x32xf32> to vector<32xf32>
    %131 = vector.shape_cast %130 : vector<32xf32> to vector<1x32xf32>
    %132 = vector.broadcast %131 : vector<1x32xf32> to vector<8x32xf32>
    %133 = arith.addf %128, %132 : vector<8x32xf32>
    %c0_65 = arith.constant 0 : index
    %c0_66 = arith.constant 0 : index
    %c0_67 = arith.constant 0 : index
    %134 = vector.load %arg16[%c0_65, %c0_66, %c0_67] : memref<1x8x32xf32, #tpu.memory_space<vmem>>, vector<1x8x32xf32>
    %135 = vector.shape_cast %134 : vector<1x8x32xf32> to vector<8x32xf32>
    %136 = vector.shape_cast %133 : vector<8x32xf32> to vector<1x8x32xf32>
    tpu.vector_store %arg16[%c0_65, %c0_66, %c0_67], %136 {strides = array<i32>} : memref<1x8x32xf32, #tpu.memory_space<vmem>>, vector<1x8x32xf32>,
    return
  }
  func.func @transform_0(%arg0: i32, %arg1: i32) -> (i32, i32, i32) {
    %c0_i32 = arith.constant 0 : i32
    %c0_i32_0 = arith.constant 0 : i32
    %c0_i32_1 = arith.constant 0 : i32
    return %arg0, %c0_i32, %c0_i32_0 : i32, i32, i32
  }
  func.func @transform_1(%arg0: i32, %arg1: i32) -> (i32, i32, i32, i32) {
    %c0_i32 = arith.constant 0 : i32
    %c0_i32_0 = arith.constant 0 : i32
    %c0_i32_1 = arith.constant 0 : i32
    %c0_i32_2 = arith.constant 0 : i32
    return %c0_i32, %c0_i32_0, %arg1, %c0_i32_1 : i32, i32, i32, i32
  }
  func.func @transform_2(%arg0: i32, %arg1: i32) -> (i32, i32) {
    %c0_i32 = arith.constant 0 : i32
    %c0_i32_0 = arith.constant 0 : i32
    %c0_i32_1 = arith.constant 0 : i32
    return %c0_i32, %c0_i32_0 : i32, i32
  }
  func.func @transform_3(%arg0: i32, %arg1: i32) -> (i32, i32) {
    %c0_i32 = arith.constant 0 : i32
    %c0_i32_0 = arith.constant 0 : i32
    %c0_i32_1 = arith.constant 0 : i32
    return %c0_i32, %c0_i32_0 : i32, i32
  }
  func.func @transform_4(%arg0: i32, %arg1: i32) -> (i32, i32) {
    %c0_i32 = arith.constant 0 : i32
    %c0_i32_0 = arith.constant 0 : i32
    %c0_i32_1 = arith.constant 0 : i32
    return %c0_i32, %c0_i32_0 : i32, i32
  }
  func.func @transform_5(%arg0: i32, %arg1: i32) -> (i32, i32) {
    %c0_i32 = arith.constant 0 : i32
    %c0_i32_0 = arith.constant 0 : i32
    %c0_i32_1 = arith.constant 0 : i32
    return %c0_i32, %c0_i32_0 : i32, i32
  }
  func.func @transform_6(%arg0: i32, %arg1: i32) -> (i32, i32) {
    %c0_i32 = arith.constant 0 : i32
    %c0_i32_0 = arith.constant 0 : i32
    %c0_i32_1 = arith.constant 0 : i32
    return %c0_i32, %c0_i32_0 : i32, i32
  }
  func.func @transform_7(%arg0: i32, %arg1: i32) -> (i32, i32) {
    %c0_i32 = arith.constant 0 : i32
    %c0_i32_0 = arith.constant 0 : i32
    %c0_i32_1 = arith.constant 0 : i32
    return %c0_i32, %c0_i32_0 : i32, i32
  }
  func.func @transform_8(%arg0: i32, %arg1: i32) -> (i32, i32) {
    %c0_i32 = arith.constant 0 : i32
    %c0_i32_0 = arith.constant 0 : i32
    %c0_i32_1 = arith.constant 0 : i32
    return %c0_i32, %c0_i32_0 : i32, i32
  }
  func.func @transform_9(%arg0: i32, %arg1: i32) -> (i32, i32) {
    %c0_i32 = arith.constant 0 : i32
    %c0_i32_0 = arith.constant 0 : i32
    %c0_i32_1 = arith.constant 0 : i32
    return %c0_i32, %c0_i32_0 : i32, i32
  }
  func.func @transform_10(%arg0: i32, %arg1: i32) -> (i32, i32) {
    %c0_i32 = arith.constant 0 : i32
    %c0_i32_0 = arith.constant 0 : i32
    %c0_i32_1 = arith.constant 0 : i32
    return %c0_i32, %c0_i32_0 : i32, i32
  }
  func.func @transform_11(%arg0: i32, %arg1: i32) -> (i32, i32) {
    %c0_i32 = arith.constant 0 : i32
    %c0_i32_0 = arith.constant 0 : i32
    %c0_i32_1 = arith.constant 0 : i32
    return %c0_i32, %c0_i32_0 : i32, i32
  }
  func.func @transform_12(%arg0: i32, %arg1: i32) -> (i32, i32) {
    %c0_i32 = arith.constant 0 : i32
    %c0_i32_0 = arith.constant 0 : i32
    %c0_i32_1 = arith.constant 0 : i32
    return %c0_i32, %c0_i32_0 : i32, i32
  }
  func.func @transform_13(%arg0: i32, %arg1: i32) -> (i32, i32) {
    %c0_i32 = arith.constant 0 : i32
    %c0_i32_0 = arith.constant 0 : i32
    %c0_i32_1 = arith.constant 0 : i32
    return %c0_i32, %c0_i32_0 : i32, i32
  }
  func.func @transform_14(%arg0: i32, %arg1: i32) -> (i32, i32, i32) {
    %c0_i32 = arith.constant 0 : i32
    %c0_i32_0 = arith.constant 0 : i32
    return %arg0, %arg1, %c0_i32 : i32, i32, i32
  }
  func.func @transform_15(%arg0: i32, %arg1: i32) -> (i32, i32, i32) {
    %c0_i32 = arith.constant 0 : i32
    %c0_i32_0 = arith.constant 0 : i32
    return %arg0, %arg1, %c0_i32 : i32, i32, i32
  }
  func.func @transform_16(%arg0: i32, %arg1: i32) -> (i32, i32, i32, i32) {
    %c0_i32 = arith.constant 0 : i32
    %c0_i32_0 = arith.constant 0 : i32
    %c0_i32_1 = arith.constant 0 : i32
    return %arg0, %c0_i32, %arg1, %c0_i32_0 : i32, i32, i32, i32
  }
}

</mosaic_0001>

<llo_original>
// kernel: tpu_custom_call.1
$region0: #{tpu_custom_call.1}
  #allocation0 [shape = 'u32[]', space=smem, size = 0x4, offset = 0x4, fixed_abs, tag = 'smem constant byte address 0x4 - core index']
  #allocation1 [shape = 'u32[144,128]{1,0:T(1,128)}', space=vmem, size = 0x12000, scoped, tag = 'internal scratch']
  #allocation2 [shape = 'bf16[16,32]{1,0:T(8,128)(2,1)}', space=vmem, size = 0x1000, scoped, tag = 'scratch operand']
  #allocation3 [shape = 'bf16[16,32]{1,0:T(8,128)(2,1)}', space=vmem, size = 0x1000, scoped, tag = 'scratch operand']
  #allocation4 [shape = 'bf16[16,32]{1,0:T(8,128)(2,1)}', space=vmem, size = 0x1000, scoped, tag = 'scratch operand']
  %s0 = inlined_call_operand.hbm [shape: f32[2,16,32], index: 0, kind: input, shape index: {}]
  %s1 = inlined_call_operand.hbm [shape: f32[1,1,16,16], index: 1, kind: input, shape index: {}]
  %s2 = inlined_call_operand.hbm [shape: bf16[32,96], index: 2, kind: input, shape index: {}]
  %s3 = inlined_call_operand.vmem [shape: f32[1,96], index: 3, kind: input, shape index: {}]
  %s4 = inlined_call_operand.hbm [shape: bf16[32,32], index: 4, kind: input, shape index: {}]
  %s5 = inlined_call_operand.vmem [shape: f32[1,32], index: 5, kind: input, shape index: {}]
  %s6 = inlined_call_operand.hbm [shape: bf16[32,32], index: 6, kind: input, shape index: {}]
  %s7 = inlined_call_operand.vmem [shape: f32[1,32], index: 7, kind: input, shape index: {}]
  %s8 = inlined_call_operand.hbm [shape: bf16[32,32], index: 8, kind: input, shape index: {}]
  %s9 = inlined_call_operand.vmem [shape: f32[1,32], index: 9, kind: input, shape index: {}]
  %s10 = inlined_call_operand.vmem [shape: f32[1,32], index: 10, kind: input, shape index: {}]
  %s11 = inlined_call_operand.vmem [shape: f32[1,32], index: 11, kind: input, shape index: {}]
  %s12 = inlined_call_operand.vmem [shape: f32[1,32], index: 12, kind: input, shape index: {}]
  %s13 = inlined_call_operand.vmem [shape: f32[1,32], index: 13, kind: input, shape index: {}]
  %s14 = inlined_call_operand.hbm [shape: f32[2,16,32], index: 14, kind: output, shape index: {0}]
  %s15 = inlined_call_operand.hbm [shape: f32[2,16,32], index: 15, kind: output, shape index: {1}]
  %s16 = inlined_call_operand.hbm [shape: f32[2,2,16,16], index: 16, kind: output, shape index: {2}]
  %17 = xla_tuple %s14, %s15, %s16
  %s18 = sld [smem:[#allocation0]]
  $region133: #{tpu_custom_call.1} parent=0
    _
  %s20 = ssub.s32 1, %s18
  %s21 = scalar_select 0, %s20, %s18
  $region1: #{tpu_custom_call.1} parent=0
    #allocation5 [shape = 'u8[16384]{0}', space=vmem, size = 0x4000, scoped, tag = 'input window, operand 0']
    #allocation6 [shape = 's32[2]{0}', space=sflag, size = 0x8, scoped, tag = 'scoped memory for tpu_custom_call.1']
    #allocation7 [shape = 's32[2]{0}', space=sflag, size = 0x8, scoped, tag = 'scoped memory for tpu_custom_call.1']
    #allocation8 [shape = 'u8[8192]{0}', space=vmem, size = 0x2000, scoped, tag = 'input window, operand 1']
    #allocation9 [shape = 's32[2]{0}', space=sflag, size = 0x8, scoped, tag = 'scoped memory for tpu_custom_call.1']
    #allocation10 [shape = 'u8[8192]{0}', space=vmem, size = 0x2000, scoped, tag = 'input window, operand 2, single buffered']
    #allocation11 [shape = 'u8[8192]{0}', space=vmem, size = 0x2000, scoped, tag = 'input window, operand 4, single buffered']
    #allocation12 [shape = 's32[1]{0}', space=sflag, size = 0x4, scoped, tag = 'scoped memory for tpu_custom_call.1']
    #allocation13 [shape = 'u8[8192]{0}', space=vmem, size = 0x2000, scoped, tag = 'input window, operand 6, single buffered']
    #allocation14 [shape = 'u8[8192]{0}', space=vmem, size = 0x2000, scoped, tag = 'input window, operand 8, single buffered']
    #allocation15 [shape = 's32[1]{0}', space=sflag, size = 0x4, scoped, tag = 'scoped memory for tpu_custom_call.1']
    #allocation16 [shape = 'u8[8192]{0}', space=vmem, size = 0x2000, scoped, tag = 'output window, operand 0']
    #allocation17 [shape = 'u8[8192]{0}', space=vmem, size = 0x2000, scoped, tag = 'output window, operand 1']
    #allocation18 [shape = 's32[2]{0}', space=sflag, size = 0x8, scoped, tag = 'scoped memory for tpu_custom_call.1']
    #allocation19 [shape = 'u8[16384]{0}', space=vmem, size = 0x4000, scoped, tag = 'output window, operand 2']
    %22 = vsyncpa [#allocation6], 0
    %s23 = scalar_lea.sflag [#allocation6], 1
    %24 = vsyncpa %s23, 0
    %25 = vsyncpa [#allocation9], 0
    %s26 = scalar_lea.sflag [#allocation9], 1
    %27 = vsyncpa %s26, 0
    %28 = vsyncpa [#allocation12], 0
    %29 = vsyncpa [#allocation15], 0
    %30 = vsyncpa [#allocation7], 0
    %s31 = scalar_lea.sflag [#allocation7], 1
    %32 = vsyncpa %s31, 0
    %33 = vsyncpa [#allocation18], 0
    %s34 = scalar_lea.sflag [#allocation18], 1
    %35 = vsyncpa %s34, 0
    loop: start=0, step=1, limit=6
    $region2: #{tpu_custom_call.1} parent=1 // loop_pre_header
      _
    $region3: #{tpu_custom_call.1} parent=1 // loop_header
      %s37 = sphi 0, %s41
      %p38 = scmp.ge.s32.totalorder %s37, 6
      %s44 = sphi 0, %s56
      %s45 = sphi 0, %s52
      %s46 = sphi 0, %s44
      %s47 = sphi 0, %s45
      %s48 = sphi 0, %s46
      %s49 = sphi 0, %s47
      %s59 = sphi 0, %s61
      %s62 = sphi 0, %s59
      %s63 = sphi 0, %s62
      %s79 = sphi 0, %s63
      %s85 = sphi 0, %s87
      %s88 = sphi 0, %s85
      %s89 = sphi 0, %s88
      %s105 = sphi 0, %s89
      %s109 = sphi 0, %s109
      %s111 = sphi 0, %s109
      %s112 = sphi 0, %s111
      %s126 = sphi 0, %s112
      %s130 = sphi 0, %s130
      %s132 = sphi 0, %s130
      %s133 = sphi 0, %s132
      %s147 = sphi 0, %s133
      %s151 = sphi 0, %s151
      %s153 = sphi 0, %s151
      %s154 = sphi 0, %s153
      %s168 = sphi 0, %s154
      %s172 = sphi 0, %s172
      %s174 = sphi 0, %s172
      %s175 = sphi 0, %s174
      %s189 = sphi 0, %s175
      %s193 = sphi 0, %s193
      %s195 = sphi 0, %s193
      %s196 = sphi 0, %s195
      %s210 = sphi 0, %s196
      %s214 = sphi 0, %s214
      %s216 = sphi 0, %s214
      %s217 = sphi 0, %s216
      %s231 = sphi 0, %s217
      %s235 = sphi 0, %s235
      %s237 = sphi 0, %s235
      %s238 = sphi 0, %s237
      %s252 = sphi 0, %s238
      %s256 = sphi 0, %s256
      %s258 = sphi 0, %s256
      %s259 = sphi 0, %s258
      %s273 = sphi 0, %s259
      %s277 = sphi 0, %s277
      %s279 = sphi 0, %s277
      %s280 = sphi 0, %s279
      %s294 = sphi 0, %s280
      %s298 = sphi 0, %s298
      %s300 = sphi 0, %s298
      %s301 = sphi 0, %s300
      %s315 = sphi 0, %s301
      %s319 = sphi 0, %s319
      %s321 = sphi 0, %s319
      %s322 = sphi 0, %s321
      %s336 = sphi 0, %s322
      %s340 = sphi 0, %s340
      %s342 = sphi 0, %s340
      %s343 = sphi 0, %s342
      %s357 = sphi 0, %s343
      %s365 = sphi 0, %s367
      %s368 = sphi 0, %s365
      %s369 = sphi 0, %s368
      %s385 = sphi 0, %s369
      %s393 = sphi 0, %s395
      %s396 = sphi 0, %s393
      %s397 = sphi 0, %s396
      %s413 = sphi 0, %s397
      %s421 = sphi 0, %s423
      %s424 = sphi 0, %s421
      %s425 = sphi 0, %s424
      %s441 = sphi 0, %s425
    $region4: #{tpu_custom_call.1} parent=1 // loop_header_branch
      %40 = sbr.rel (%p38) target = $region8
    $region5: #{tpu_custom_call.1} parent=1 // loop_body
      %s42 = ssub.s32 %s37, 1
      %s43 = ssub.s32 %s37, 2
      %s50 = sadd.s32 1, %s45
      %p51 = scmp.ge.s32.totalorder %s50, 2
      %s52 = scalar_select %p51, 0, %s50
      %s53 = sadd.s32 1, %s44
      %s54 = scalar_select %p51, %s53, %s44
      %p55 = scmp.ge.s32.totalorder %s54, 2
      %s56 = scalar_select %p55, 0, %s54
      %s57 = ssub.s32 %s44, %s56
      %p58 = scmp.eq.s32.totalorder %s57, 0
      %s60 = sadd.s32 %s59, 1
      %s61 = scalar_select %p58, %s59, %s60
      %p64 = pneg %p58
      %p65 = scmp.eq.s32.totalorder %s37, 3
      %p66 = por %p64, %p65
      %p67 = scmp.ne.s32.totalorder %s59, %s62
      %p68 = scmp.eq.s32.totalorder %s37, 0
      %p69 = por %p67, %p68
      %p70 = scmp.ne.s32.totalorder %s59, %s62
      %p71 = scmp.eq.s32.totalorder %s42, 3
      %p72 = por %p70, %p71
      %p73 = scmp.ne.s32.totalorder %s62, %s63
      %p74 = scmp.eq.s32.totalorder %s42, 0
      %p75 = por %p73, %p74
      %p76 = scmp.ne.s32.totalorder %s62, %s63
      %p77 = scmp.eq.s32.totalorder %s43, 3
      %p78 = por %p76, %p77
      %p80 = scmp.ne.s32.totalorder %s63, %s79
      %p81 = scmp.eq.s32.totalorder %s43, 0
      %p82 = por %p80, %p81
      %s83 = ssub.s32 %s45, %s52
      %p84 = scmp.eq.s32.totalorder %s83, 0
      %s86 = sadd.s32 %s85, 1
      %s87 = scalar_select %p84, %s85, %s86
      %p90 = pneg %p84
      %p91 = scmp.eq.s32.totalorder %s37, 3
      %p92 = por %p90, %p91
      %p93 = scmp.ne.s32.totalorder %s85, %s88
      %p94 = scmp.eq.s32.totalorder %s37, 0
      %p95 = por %p93, %p94
      %p96 = scmp.ne.s32.totalorder %s85, %s88
      %p97 = scmp.eq.s32.totalorder %s42, 3
      %p98 = por %p96, %p97
      %p99 = scmp.ne.s32.totalorder %s88, %s89
      %p100 = scmp.eq.s32.totalorder %s42, 0
      %p101 = por %p99, %p100
      %p102 = scmp.ne.s32.totalorder %s88, %s89
      %p103 = scmp.eq.s32.totalorder %s43, 3
      %p104 = por %p102, %p103
      %p106 = scmp.ne.s32.totalorder %s89, %s105
      %p107 = scmp.eq.s32.totalorder %s43, 0
      %p108 = por %p106, %p107
      %s110 = sadd.s32 %s109, 1
      %p113 = scmp.eq.s32.totalorder %s37, 3
      %p114 = scmp.ne.s32.totalorder %s109, %s111
      %p115 = scmp.eq.s32.totalorder %s37, 0
      %p116 = por %p114, %p115
      %p117 = scmp.ne.s32.totalorder %s109, %s111
      %p118 = scmp.eq.s32.totalorder %s42, 3
      %p119 = por %p117, %p118
      %p120 = scmp.ne.s32.totalorder %s111, %s112
      %p121 = scmp.eq.s32.totalorder %s42, 0
      %p122 = por %p120, %p121
      %p123 = scmp.ne.s32.totalorder %s111, %s112
      %p124 = scmp.eq.s32.totalorder %s43, 3
      %p125 = por %p123, %p124
      %p127 = scmp.ne.s32.totalorder %s112, %s126
      %p128 = scmp.eq.s32.totalorder %s43, 0
      %p129 = por %p127, %p128
      %s131 = sadd.s32 %s130, 1
      %p134 = scmp.eq.s32.totalorder %s37, 3
      %p135 = scmp.ne.s32.totalorder %s130, %s132
      %p136 = scmp.eq.s32.totalorder %s37, 0
      %p137 = por %p135, %p136
      %p138 = scmp.ne.s32.totalorder %s130, %s132
      %p139 = scmp.eq.s32.totalorder %s42, 3
      %p140 = por %p138, %p139
      %p141 = scmp.ne.s32.totalorder %s132, %s133
      %p142 = scmp.eq.s32.totalorder %s42, 0
      %p143 = por %p141, %p142
      %p144 = scmp.ne.s32.totalorder %s132, %s133
      %p145 = scmp.eq.s32.totalorder %s43, 3
      %p146 = por %p144, %p145
      %p148 = scmp.ne.s32.totalorder %s133, %s147
      %p149 = scmp.eq.s32.totalorder %s43, 0
      %p150 = por %p148, %p149
      %s152 = sadd.s32 %s151, 1
      %p155 = scmp.eq.s32.totalorder %s37, 3
      %p156 = scmp.ne.s32.totalorder %s151, %s153
      %p157 = scmp.eq.s32.totalorder %s37, 0
      %p158 = por %p156, %p157
      %p159 = scmp.ne.s32.totalorder %s151, %s153
      %p160 = scmp.eq.s32.totalorder %s42, 3
      %p161 = por %p159, %p160
      %p162 = scmp.ne.s32.totalorder %s153, %s154
      %p163 = scmp.eq.s32.totalorder %s42, 0
      %p164 = por %p162, %p163
      %p165 = scmp.ne.s32.totalorder %s153, %s154
      %p166 = scmp.eq.s32.totalorder %s43, 3
      %p167 = por %p165, %p166
      %p169 = scmp.ne.s32.totalorder %s154, %s168
      %p170 = scmp.eq.s32.totalorder %s43, 0
      %p171 = por %p169, %p170
      %s173 = sadd.s32 %s172, 1
      %p176 = scmp.eq.s32.totalorder %s37, 3
      %p177 = scmp.ne.s32.totalorder %s172, %s174
      %p178 = scmp.eq.s32.totalorder %s37, 0
      %p179 = por %p177, %p178
      %p180 = scmp.ne.s32.totalorder %s172, %s174
      %p181 = scmp.eq.s32.totalorder %s42, 3
      %p182 = por %p180, %p181
      %p183 = scmp.ne.s32.totalorder %s174, %s175
      %p184 = scmp.eq.s32.totalorder %s42, 0
      %p185 = por %p183, %p184
      %p186 = scmp.ne.s32.totalorder %s174, %s175
      %p187 = scmp.eq.s32.totalorder %s43, 3
      %p188 = por %p186, %p187
      %p190 = scmp.ne.s32.totalorder %s175, %s189
      %p191 = scmp.eq.s32.totalorder %s43, 0
      %p192 = por %p190, %p191
      %s194 = sadd.s32 %s193, 1
      %p197 = scmp.eq.s32.totalorder %s37, 3
      %p198 = scmp.ne.s32.totalorder %s193, %s195
      %p199 = scmp.eq.s32.totalorder %s37, 0
      %p200 = por %p198, %p199
      %p201 = scmp.ne.s32.totalorder %s193, %s195
      %p202 = scmp.eq.s32.totalorder %s42, 3
      %p203 = por %p201, %p202
      %p204 = scmp.ne.s32.totalorder %s195, %s196
      %p205 = scmp.eq.s32.totalorder %s42, 0
      %p206 = por %p204, %p205
      %p207 = scmp.ne.s32.totalorder %s195, %s196
      %p208 = scmp.eq.s32.totalorder %s43, 3
      %p209 = por %p207, %p208
      %p211 = scmp.ne.s32.totalorder %s196, %s210
      %p212 = scmp.eq.s32.totalorder %s43, 0
      %p213 = por %p211, %p212
      %s215 = sadd.s32 %s214, 1
      %p218 = scmp.eq.s32.totalorder %s37, 3
      %p219 = scmp.ne.s32.totalorder %s214, %s216
      %p220 = scmp.eq.s32.totalorder %s37, 0
      %p221 = por %p219, %p220
      %p222 = scmp.ne.s32.totalorder %s214, %s216
      %p223 = scmp.eq.s32.totalorder %s42, 3
      %p224 = por %p222, %p223
      %p225 = scmp.ne.s32.totalorder %s216, %s217
      %p226 = scmp.eq.s32.totalorder %s42, 0
      %p227 = por %p225, %p226
      %p228 = scmp.ne.s32.totalorder %s216, %s217
      %p229 = scmp.eq.s32.totalorder %s43, 3
      %p230 = por %p228, %p229
      %p232 = scmp.ne.s32.totalorder %s217, %s231
      %p233 = scmp.eq.s32.totalorder %s43, 0
      %p234 = por %p232, %p233
      %s236 = sadd.s32 %s235, 1
      %p239 = scmp.eq.s32.totalorder %s37, 3
      %p240 = scmp.ne.s32.totalorder %s235, %s237
      %p241 = scmp.eq.s32.totalorder %s37, 0
      %p242 = por %p240, %p241
      %p243 = scmp.ne.s32.totalorder %s235, %s237
      %p244 = scmp.eq.s32.totalorder %s42, 3
      %p245 = por %p243, %p244
      %p246 = scmp.ne.s32.totalorder %s237, %s238
      %p247 = scmp.eq.s32.totalorder %s42, 0
      %p248 = por %p246, %p247
      %p249 = scmp.ne.s32.totalorder %s237, %s238
      %p250 = scmp.eq.s32.totalorder %s43, 3
      %p251 = por %p249, %p250
      %p253 = scmp.ne.s32.totalorder %s238, %s252
      %p254 = scmp.eq.s32.totalorder %s43, 0
      %p255 = por %p253, %p254
      %s257 = sadd.s32 %s256, 1
      %p260 = scmp.eq.s32.totalorder %s37, 3
      %p261 = scmp.ne.s32.totalorder %s256, %s258
      %p262 = scmp.eq.s32.totalorder %s37, 0
      %p263 = por %p261, %p262
      %p264 = scmp.ne.s32.totalorder %s256, %s258
      %p265 = scmp.eq.s32.totalorder %s42, 3
      %p266 = por %p264, %p265
      %p267 = scmp.ne.s32.totalorder %s258, %s259
      %p268 = scmp.eq.s32.totalorder %s42, 0
      %p269 = por %p267, %p268
      %p270 = scmp.ne.s32.totalorder %s258, %s259
      %p271 = scmp.eq.s32.totalorder %s43, 3
      %p272 = por %p270, %p271
      %p274 = scmp.ne.s32.totalorder %s259, %s273
      %p275 = scmp.eq.s32.totalorder %s43, 0
      %p276 = por %p274, %p275
      %s278 = sadd.s32 %s277, 1
      %p281 = scmp.eq.s32.totalorder %s37, 3
      %p282 = scmp.ne.s32.totalorder %s277, %s279
      %p283 = scmp.eq.s32.totalorder %s37, 0
      %p284 = por %p282, %p283
      %p285 = scmp.ne.s32.totalorder %s277, %s279
      %p286 = scmp.eq.s32.totalorder %s42, 3
      %p287 = por %p285, %p286
      %p288 = scmp.ne.s32.totalorder %s279, %s280
      %p289 = scmp.eq.s32.totalorder %s42, 0
      %p290 = por %p288, %p289
      %p291 = scmp.ne.s32.totalorder %s279, %s280
      %p292 = scmp.eq.s32.totalorder %s43, 3
      %p293 = por %p291, %p292
      %p295 = scmp.ne.s32.totalorder %s280, %s294
      %p296 = scmp.eq.s32.totalorder %s43, 0
      %p297 = por %p295, %p296
      %s299 = sadd.s32 %s298, 1
      %p302 = scmp.eq.s32.totalorder %s37, 3
      %p303 = scmp.ne.s32.totalorder %s298, %s300
      %p304 = scmp.eq.s32.totalorder %s37, 0
      %p305 = por %p303, %p304
      %p306 = scmp.ne.s32.totalorder %s298, %s300
      %p307 = scmp.eq.s32.totalorder %s42, 3
      %p308 = por %p306, %p307
      %p309 = scmp.ne.s32.totalorder %s300, %s301
      %p310 = scmp.eq.s32.totalorder %s42, 0
      %p311 = por %p309, %p310
      %p312 = scmp.ne.s32.totalorder %s300, %s301
      %p313 = scmp.eq.s32.totalorder %s43, 3
      %p314 = por %p312, %p313
      %p316 = scmp.ne.s32.totalorder %s301, %s315
      %p317 = scmp.eq.s32.totalorder %s43, 0
      %p318 = por %p316, %p317
      %s320 = sadd.s32 %s319, 1
      %p323 = scmp.eq.s32.totalorder %s37, 3
      %p324 = scmp.ne.s32.totalorder %s319, %s321
      %p325 = scmp.eq.s32.totalorder %s37, 0
      %p326 = por %p324, %p325
      %p327 = scmp.ne.s32.totalorder %s319, %s321
      %p328 = scmp.eq.s32.totalorder %s42, 3
      %p329 = por %p327, %p328
      %p330 = scmp.ne.s32.totalorder %s321, %s322
      %p331 = scmp.eq.s32.totalorder %s42, 0
      %p332 = por %p330, %p331
      %p333 = scmp.ne.s32.totalorder %s321, %s322
      %p334 = scmp.eq.s32.totalorder %s43, 3
      %p335 = por %p333, %p334
      %p337 = scmp.ne.s32.totalorder %s322, %s336
      %p338 = scmp.eq.s32.totalorder %s43, 0
      %p339 = por %p337, %p338
      %s341 = sadd.s32 %s340, 1
      %p344 = scmp.eq.s32.totalorder %s37, 3
      %p345 = scmp.ne.s32.totalorder %s340, %s342
      %p346 = scmp.eq.s32.totalorder %s37, 0
      %p347 = por %p345, %p346
      %p348 = scmp.ne.s32.totalorder %s340, %s342
      %p349 = scmp.eq.s32.totalorder %s42, 3
      %p350 = por %p348, %p349
      %p351 = scmp.ne.s32.totalorder %s342, %s343
      %p352 = scmp.eq.s32.totalorder %s42, 0
      %p353 = por %p351, %p352
      %p354 = scmp.ne.s32.totalorder %s342, %s343
      %p355 = scmp.eq.s32.totalorder %s43, 3
      %p356 = por %p354, %p355
      %p358 = scmp.ne.s32.totalorder %s343, %s357
      %p359 = scmp.eq.s32.totalorder %s43, 0
      %p360 = por %p358, %p359
      %s361 = ssub.s32 %s44, %s56
      %s362 = ssub.s32 %s45, %s52
      %s363 = sor.u32 %s361, %s362
      %p364 = scmp.eq.s32.totalorder %s363, 0
      %s366 = sadd.s32 %s365, 1
      %s367 = scalar_select %p364, %s365, %s366
      %p370 = pneg %p364
      %p371 = scmp.eq.s32.totalorder %s37, 3
      %p372 = por %p370, %p371
      %p373 = scmp.ne.s32.totalorder %s365, %s368
      %p374 = scmp.eq.s32.totalorder %s37, 0
      %p375 = por %p373, %p374
      %p376 = scmp.ne.s32.totalorder %s365, %s368
      %p377 = scmp.eq.s32.totalorder %s42, 3
      %p378 = por %p376, %p377
      %p379 = scmp.ne.s32.totalorder %s368, %s369
      %p380 = scmp.eq.s32.totalorder %s42, 0
      %p381 = por %p379, %p380
      %p382 = scmp.ne.s32.totalorder %s368, %s369
      %p383 = scmp.eq.s32.totalorder %s43, 3
      %p384 = por %p382, %p383
      %p386 = scmp.ne.s32.totalorder %s369, %s385
      %p387 = scmp.eq.s32.totalorder %s43, 0
      %p388 = por %p386, %p387
      %s389 = ssub.s32 %s44, %s56
      %s390 = ssub.s32 %s45, %s52
      %s391 = sor.u32 %s389, %s390
      %p392 = scmp.eq.s32.totalorder %s391, 0
      %s394 = sadd.s32 %s393, 1
      %s395 = scalar_select %p392, %s393, %s394
      %p398 = pneg %p392
      %p399 = scmp.eq.s32.totalorder %s37, 3
      %p400 = por %p398, %p399
      %p401 = scmp.ne.s32.totalorder %s393, %s396
      %p402 = scmp.eq.s32.totalorder %s37, 0
      %p403 = por %p401, %p402
      %p404 = scmp.ne.s32.totalorder %s393, %s396
      %p405 = scmp.eq.s32.totalorder %s42, 3
      %p406 = por %p404, %p405
      %p407 = scmp.ne.s32.totalorder %s396, %s397
      %p408 = scmp.eq.s32.totalorder %s42, 0
      %p409 = por %p407, %p408
      %p410 = scmp.ne.s32.totalorder %s396, %s397
      %p411 = scmp.eq.s32.totalorder %s43, 3
      %p412 = por %p410, %p411
      %p414 = scmp.ne.s32.totalorder %s397, %s413
      %p415 = scmp.eq.s32.totalorder %s43, 0
      %p416 = por %p414, %p415
      %s417 = ssub.s32 %s44, %s56
      %s418 = ssub.s32 %s45, %s52
      %s419 = sor.u32 %s417, %s418
      %p420 = scmp.eq.s32.totalorder %s419, 0
      %s422 = sadd.s32 %s421, 1
      %s423 = scalar_select %p420, %s421, %s422
      %p426 = pneg %p420
      %p427 = scmp.eq.s32.totalorder %s37, 3
      %p428 = por %p426, %p427
      %p429 = scmp.ne.s32.totalorder %s421, %s424
      %p430 = scmp.eq.s32.totalorder %s37, 0
      %p431 = por %p429, %p430
      %p432 = scmp.ne.s32.totalorder %s421, %s424
      %p433 = scmp.eq.s32.totalorder %s42, 3
      %p434 = por %p432, %p433
      %p435 = scmp.ne.s32.totalorder %s424, %s425
      %p436 = scmp.eq.s32.totalorder %s42, 0
      %p437 = por %p435, %p436
      %p438 = scmp.ne.s32.totalorder %s424, %s425
      %p439 = scmp.eq.s32.totalorder %s43, 3
      %p440 = por %p438, %p439
      %p442 = scmp.ne.s32.totalorder %s425, %s441
      %p443 = scmp.eq.s32.totalorder %s43, 0
      %p444 = por %p442, %p443
      %p445 = scmp.le.s32.totalorder 1, %s37
      %p446 = scmp.lt.s32.totalorder %s37, 5
      %p447 = pnand %p445, %p446
      %p448 = pneg %p447
      // Predicated region
      $region9: #{tpu_custom_call.1} parent=5 // pred_check
        _
      $region10: #{tpu_custom_call.1} parent=5 // pred_check_branch
        %450 = sbr.rel (%p447) target = $region12
      $region11: #{tpu_custom_call.1} parent=5 // pred_region
        %s451 = ssub.s32 %s37, 1
        // Predicated region
        $region13: #{tpu_custom_call.1} parent=11 // pred_check
          %p452 = pneg %p122
        $region14: #{tpu_custom_call.1} parent=11 // pred_check_branch
          %454 = sbr.rel (%p452) target = $region16
        $region15: #{tpu_custom_call.1} parent=11 // pred_region
          %s456 = ssub.s32 256, 256
          %457 = vsyncadd [#allocation9], %s456
          %s458 = sshll.u32 [#allocation10], 4
          %s459 = int_to_ptr.vmem [resolvable:$true] %s458
          %464 = dma.hbm_to_vmem [thread:$0]  %s2, 256, %s459, [#allocation9], 64, 64, 4
        $region16: #{tpu_custom_call.1} parent=11 // pred_fallthru
          _
        // Predicated region
        $region17: #{tpu_custom_call.1} parent=11 // pred_check
          %p465 = pneg %p143
        $region18: #{tpu_custom_call.1} parent=11 // pred_check_branch
          %467 = sbr.rel (%p465) target = $region20
        $region19: #{tpu_custom_call.1} parent=11 // pred_region
          _
        $region20: #{tpu_custom_call.1} parent=11 // pred_fallthru
          _
        // Predicated region
        $region21: #{tpu_custom_call.1} parent=11 // pred_check
          %p468 = pneg %p164
        $region22: #{tpu_custom_call.1} parent=11 // pred_check_branch
          %470 = sbr.rel (%p468) target = $region24
        $region23: #{tpu_custom_call.1} parent=11 // pred_region
          %s472 = ssub.s32 256, 256
          %473 = vsyncadd [#allocation12], %s472
          %s474 = sshll.u32 [#allocation11], 4
          %s475 = int_to_ptr.vmem [resolvable:$true] %s474
          %480 = dma.hbm_to_vmem [thread:$0]  %s4, 256, %s475, [#allocation12], 64, 64, 4
        $region24: #{tpu_custom_call.1} parent=11 // pred_fallthru
          _
        // Predicated region
        $region25: #{tpu_custom_call.1} parent=11 // pred_check
          %p481 = pneg %p185
        $region26: #{tpu_custom_call.1} parent=11 // pred_check_branch
          %483 = sbr.rel (%p481) target = $region28
        $region27: #{tpu_custom_call.1} parent=11 // pred_region
          _
        $region28: #{tpu_custom_call.1} parent=11 // pred_fallthru
          _
        // Predicated region
        $region29: #{tpu_custom_call.1} parent=11 // pred_check
          %p484 = pneg %p206
        $region30: #{tpu_custom_call.1} parent=11 // pred_check_branch
          %486 = sbr.rel (%p484) target = $region32
        $region31: #{tpu_custom_call.1} parent=11 // pred_region
          %s488 = ssub.s32 256, 256
          %489 = vsyncadd [#allocation12], %s488
          %s490 = sshll.u32 [#allocation13], 4
          %s491 = int_to_ptr.vmem [resolvable:$true] %s490
          %496 = dma.hbm_to_vmem [thread:$0]  %s6, 256, %s491, [#allocation12], 64, 64, 4
        $region32: #{tpu_custom_call.1} parent=11 // pred_fallthru
          _
        // Predicated region
        $region33: #{tpu_custom_call.1} parent=11 // pred_check
          %p497 = pneg %p227
        $region34: #{tpu_custom_call.1} parent=11 // pred_check_branch
          %499 = sbr.rel (%p497) target = $region36
        $region35: #{tpu_custom_call.1} parent=11 // pred_region
          _
        $region36: #{tpu_custom_call.1} parent=11 // pred_fallthru
          _
        // Predicated region
        $region37: #{tpu_custom_call.1} parent=11 // pred_check
          %p500 = pneg %p248
        $region38: #{tpu_custom_call.1} parent=11 // pred_check_branch
          %502 = sbr.rel (%p500) target = $region40
        $region39: #{tpu_custom_call.1} parent=11 // pred_region
          %s504 = ssub.s32 256, 256
          %505 = vsyncadd [#allocation15], %s504
          %s506 = sshll.u32 [#allocation14], 4
          %s507 = int_to_ptr.vmem [resolvable:$true] %s506
          %512 = dma.hbm_to_vmem [thread:$0]  %s8, 256, %s507, [#allocation15], 64, 64, 4
        $region40: #{tpu_custom_call.1} parent=11 // pred_fallthru
          _
        // Predicated region
        $region41: #{tpu_custom_call.1} parent=11 // pred_check
          %p513 = pneg %p269
        $region42: #{tpu_custom_call.1} parent=11 // pred_check_branch
          %515 = sbr.rel (%p513) target = $region44
        $region43: #{tpu_custom_call.1} parent=11 // pred_region
          _
        $region44: #{tpu_custom_call.1} parent=11 // pred_fallthru
          _
        // Predicated region
        $region45: #{tpu_custom_call.1} parent=11 // pred_check
          %p516 = pneg %p290
        $region46: #{tpu_custom_call.1} parent=11 // pred_check_branch
          %518 = sbr.rel (%p516) target = $region48
        $region47: #{tpu_custom_call.1} parent=11 // pred_region
          _
        $region48: #{tpu_custom_call.1} parent=11 // pred_fallthru
          _
        // Predicated region
        $region49: #{tpu_custom_call.1} parent=11 // pred_check
          %p519 = pneg %p311
        $region50: #{tpu_custom_call.1} parent=11 // pred_check_branch
          %521 = sbr.rel (%p519) target = $region52
        $region51: #{tpu_custom_call.1} parent=11 // pred_region
          _
        $region52: #{tpu_custom_call.1} parent=11 // pred_fallthru
          _
        // Predicated region
        $region53: #{tpu_custom_call.1} parent=11 // pred_check
          %p522 = pneg %p332
        $region54: #{tpu_custom_call.1} parent=11 // pred_check_branch
          %524 = sbr.rel (%p522) target = $region56
        $region55: #{tpu_custom_call.1} parent=11 // pred_region
          _
        $region56: #{tpu_custom_call.1} parent=11 // pred_fallthru
          _
        // Predicated region
        $region57: #{tpu_custom_call.1} parent=11 // pred_check
          %p525 = pneg %p353
        $region58: #{tpu_custom_call.1} parent=11 // pred_check_branch
          %527 = sbr.rel (%p525) target = $region60
        $region59: #{tpu_custom_call.1} parent=11 // pred_region
          _
        $region60: #{tpu_custom_call.1} parent=11 // pred_fallthru
          _
      $region12: #{tpu_custom_call.1} parent=5 // pred_fallthru
        _
      %p528 = scmp.lt.s32.totalorder %s37, 4
      // Predicated region
      $region61: #{tpu_custom_call.1} parent=5 // pred_check
        %p529 = pneg %p528
      $region62: #{tpu_custom_call.1} parent=5 // pred_check_branch
        %531 = sbr.rel (%p529) target = $region64
      $region63: #{tpu_custom_call.1} parent=5 // pred_region
        // Predicated region
        $region65: #{tpu_custom_call.1} parent=63 // pred_check
          %p532 = pneg %p69
        $region66: #{tpu_custom_call.1} parent=63 // pred_check_branch
          %534 = sbr.rel (%p532) target = $region68
        $region67: #{tpu_custom_call.1} parent=63 // pred_region
          %s535 = sand.u32 %s59, 1
          %s536 = scalar_lea.sflag [#allocation6], %s535
          %s537 = sand.u32 %s59, 1
          %s538 = smul.addr %s537, 16
          %s539 = scalar_lea.vmem [#allocation5], %s538
          %s541 = ssub.s32 256, 256
          %542 = vsyncadd %s536, %s541
          %s543 = smul.addr %s44, 2
          %s544 = smul.addr %s543, 128
          %s545 = scalar_lea.hbm %s0, %s544
          %s546 = sshll.u32 %s539, 4
          %s547 = int_to_ptr.vmem [resolvable:$true] %s546
          %552 = dma.hbm_to_vmem [thread:$0]  %s545, 256, %s547, %s536, 128, 128, 8
        $region68: #{tpu_custom_call.1} parent=63 // pred_fallthru
          _
        // Predicated region
        $region69: #{tpu_custom_call.1} parent=63 // pred_check
          %p553 = pneg %p95
        $region70: #{tpu_custom_call.1} parent=63 // pred_check_branch
          %555 = sbr.rel (%p553) target = $region72
        $region71: #{tpu_custom_call.1} parent=63 // pred_region
          %s556 = sand.u32 %s37, 1
          %s557 = scalar_lea.sflag [#allocation9], %s556
          %s558 = sand.u32 %s85, 1
          %s559 = smul.addr %s558, 8
          %s560 = scalar_lea.vmem [#allocation8], %s559
          %s562 = ssub.s32 128, 128
          %563 = vsyncadd %s557, %s562
          %s564 = smul.addr %s45, 128
          %s565 = scalar_lea.hbm %s1, %s564
          %s567 = sshll.u32 %s560, 4
          %s568 = int_to_ptr.vmem [resolvable:$true] %s567
          %570 = dma.hbm_to_vmem [thread:$0]  %s565, 128, %s568, %s557
        $region72: #{tpu_custom_call.1} parent=63 // pred_fallthru
          _
      $region64: #{tpu_custom_call.1} parent=5 // pred_fallthru
        _
      %p571 = scmp.le.s32.totalorder 1, %s37
      %p572 = scmp.lt.s32.totalorder %s37, 5
      %p573 = pnand %p571, %p572
      %p574 = pneg %p573
      // Predicated region
      $region73: #{tpu_custom_call.1} parent=5 // pred_check
        _
      $region74: #{tpu_custom_call.1} parent=5 // pred_check_branch
        %576 = sbr.rel (%p573) target = $region76
      $region75: #{tpu_custom_call.1} parent=5 // pred_region
        %s577 = ssub.s32 %s37, 1
        %s578 = sand.u32 %s62, 1
        %s579 = scalar_lea.sflag [#allocation6], %s578
        %s580 = sand.u32 %s62, 1
        %s581 = smul.addr %s580, 16
        %s582 = scalar_lea.vmem [#allocation5], %s581
        // Predicated region
        $region77: #{tpu_custom_call.1} parent=75 // pred_check
          %p583 = pneg %p75
        $region78: #{tpu_custom_call.1} parent=75 // pred_check_branch
          %585 = sbr.rel (%p583) target = $region80
        $region79: #{tpu_custom_call.1} parent=75 // pred_region
          %586 = dma.done %s579, 256
        $region80: #{tpu_custom_call.1} parent=75 // pred_fallthru
          _
        %s587 = sand.u32 %s42, 1
        %s588 = scalar_lea.sflag [#allocation9], %s587
        %s589 = sand.u32 %s88, 1
        %s590 = smul.addr %s589, 8
        %s591 = scalar_lea.vmem [#allocation8], %s590
        // Predicated region
        $region81: #{tpu_custom_call.1} parent=75 // pred_check
          %p592 = pneg %p101
        $region82: #{tpu_custom_call.1} parent=75 // pred_check_branch
          %594 = sbr.rel (%p592) target = $region84
        $region83: #{tpu_custom_call.1} parent=75 // pred_region
          %595 = dma.done %s588, 128
        $region84: #{tpu_custom_call.1} parent=75 // pred_fallthru
          _
        // Predicated region
        $region85: #{tpu_custom_call.1} parent=75 // pred_check
          %p596 = pneg %p122
        $region86: #{tpu_custom_call.1} parent=75 // pred_check_branch
          %598 = sbr.rel (%p596) target = $region88
        $region87: #{tpu_custom_call.1} parent=75 // pred_region
          %599 = dma.done [#allocation9], 256
        $region88: #{tpu_custom_call.1} parent=75 // pred_fallthru
          _
        // Predicated region
        $region89: #{tpu_custom_call.1} parent=75 // pred_check
          %p600 = pneg %p164
        $region90: #{tpu_custom_call.1} parent=75 // pred_check_branch
          %602 = sbr.rel (%p600) target = $region92
        $region91: #{tpu_custom_call.1} parent=75 // pred_region
          %603 = dma.done [#allocation12], 256
        $region92: #{tpu_custom_call.1} parent=75 // pred_fallthru
          _
        // Predicated region
        $region93: #{tpu_custom_call.1} parent=75 // pred_check
          %p604 = pneg %p206
        $region94: #{tpu_custom_call.1} parent=75 // pred_check_branch
          %606 = sbr.rel (%p604) target = $region96
        $region95: #{tpu_custom_call.1} parent=75 // pred_region
          %607 = dma.done [#allocation12], 256
        $region96: #{tpu_custom_call.1} parent=75 // pred_fallthru
          _
        // Predicated region
        $region97: #{tpu_custom_call.1} parent=75 // pred_check
          %p608 = pneg %p248
        $region98: #{tpu_custom_call.1} parent=75 // pred_check_branch
          %610 = sbr.rel (%p608) target = $region100
        $region99: #{tpu_custom_call.1} parent=75 // pred_region
          %611 = dma.done [#allocation15], 256
        $region100: #{tpu_custom_call.1} parent=75 // pred_fallthru
          _
        %s612 = sand.u32 %s62, 1
        %s613 = scalar_lea.sflag [#allocation6], %s612
        %s614 = sand.u32 %s62, 1
        %s615 = smul.addr %s614, 16
        %s616 = scalar_lea.vmem [#allocation5], %s615
        %p617 = pneg %p75
        %p618 = pneg %p72
        %s619 = sand.u32 %s42, 1
        %s620 = scalar_lea.sflag [#allocation9], %s619
        %s621 = sand.u32 %s88, 1
        %s622 = smul.addr %s621, 8
        %s623 = scalar_lea.vmem [#allocation8], %s622
        %p624 = pneg %p101
        %p625 = pneg %p98
        %p626 = pneg %p122
        %p627 = pneg %p119
        %p628 = pneg %p143
        %p629 = pneg %p140
        %p630 = pneg %p164
        %p631 = pneg %p161
        %p632 = pneg %p185
        %p633 = pneg %p182
        %p634 = pneg %p206
        %p635 = pneg %p203
        %p636 = pneg %p227
        %p637 = pneg %p224
        %p638 = pneg %p248
        %p639 = pneg %p245
        %p640 = pneg %p269
        %p641 = pneg %p266
        %p642 = pneg %p290
        %p643 = pneg %p287
        %p644 = pneg %p311
        %p645 = pneg %p308
        %p646 = pneg %p332
        %p647 = pneg %p329
        %p648 = pneg %p353
        %p649 = pneg %p350
        %p650 = pneg %p381
        %p651 = pneg %p378
        %s652 = sand.u32 %s368, 1
        %s653 = scalar_lea.sflag [#allocation7], %s652
        %s654 = sand.u32 %s368, 1
        %s655 = smul.addr %s654, 8
        %s656 = scalar_lea.vmem [#allocation16], %s655
        %p657 = pneg %p409
        %p658 = pneg %p406
        %s659 = sand.u32 %s42, 1
        %s660 = scalar_lea.sflag [#allocation18], %s659
        %s661 = sand.u32 %s396, 1
        %s662 = smul.addr %s661, 8
        %s663 = scalar_lea.vmem [#allocation17], %s662
        %p664 = pneg %p437
        %p665 = pneg %p434
        %s666 = sand.u32 %s42, 1
        %s667 = scalar_lea.sflag [#allocation18], %s666
        %s668 = sand.u32 %s424, 1
        %s669 = smul.addr %s668, 16
        %s670 = scalar_lea.vmem [#allocation19], %s669
        %p672 = scmp.eq.s32.totalorder %s47, 0
        // Predicated region
        $region101: #{tpu_custom_call.1} parent=75 // pred_check
          %p673 = pneg %p672
        $region102: #{tpu_custom_call.1} parent=75 // pred_check_branch
          %675 = sbr.rel (%p673) target = $region104
        $region103: #{tpu_custom_call.1} parent=75 // pred_region
          %v676 = vld [vmem:[%s582] sm:$0xff]
          %v677 = vld [vmem:[%s582 + $0x8] sm:$0xff]
          %v678 = vpack.c.bf16 %v677, %v676
          %v679 = vld [vmem:[#allocation10] sm:$0xf]
          %v680 = vld [vmem:[#allocation10 + $0x4] sm:$0xf]
          %v681 = vld [vmem:[#allocation10 + $0x8] sm:$0xf]
          %v682 = vld [vmem:[#allocation10 + $0xc] sm:$0xf]
          %v683 = vld [vmem:[%s3] sm:$0x1]
          %v685 = vlaneseq
          %v686 = vshrl.u32 %v685, 7
          %v687 = vsub.s32 0, %v686
          %v688 = vrot.slane %v683, %v687
          %v694 = vunpack.c.l.b16 %v679
          %v695 = vunpack.c.l.b16 %v680
          %v696 = vunpack.c.l.b16 %v681
          %v697 = vunpack.c.l.b16 %v682
          %v698 = vpack.c.b16 %v695, %v694
          %v699 = vpack.c.b16 %v697, %v696
          %vm702 = vcmask 261120
          %v704 = vsel %vm702, %v678, 0
          %706 = vmatprep.subr.bf16.mxu0 0
          %707 = vmatpush1.bf16.msra.mxu0 0
          %708 = vmatprep.subr.bf16.mxu0 0
          %709 = vmatpush1.bf16.msra.mxu0 0
          %710 = vmatprep.subr.bf16.mxu0 0
          %711 = vmatpush1.bf16.msra.mxu0 0
          %712 = vmatprep.subr.bf16.mxu0 0
          %713 = vmatpush1.bf16.msra.mxu0 0
          %714 = vmatprep.subr.bf16.mxu0 0
          %715 = vmatpush1.bf16.msra.mxu0 0
          %716 = vmatprep.subr.bf16.mxu0 0
          %717 = vmatpush1.bf16.msra.mxu0 0
          %718 = vmatprep.subr.bf16.mxu0 0
          %719 = vmatpush1.bf16.msra.mxu0 %v699
          %720 = vmatprep.subr.bf16.mxu0 0
          %721 = vmatpush1.bf16.msra.mxu0 %v698
          %722 = vmatprep.subr.bf16.mxu0 0
          %723 = vmatpush2.bf16.msra.mxu0 0
          %724 = vmatprep.subr.bf16.mxu0 0
          %725 = vmatpush2.bf16.msra.mxu0 0
          %726 = vmatprep.subr.bf16.mxu0 0
          %727 = vmatpush2.bf16.msra.mxu0 0
          %728 = vmatprep.subr.bf16.mxu0 0
          %729 = vmatpush2.bf16.msra.mxu0 0
          %730 = vmatprep.subr.bf16.mxu0 0
          %731 = vmatpush2.bf16.msra.mxu0 0
          %732 = vmatprep.subr.bf16.mxu0 0
          %733 = vmatpush2.bf16.msra.mxu0 0
          %734 = vmatprep.subr.bf16.mxu0 0
          %735 = vmatpush2.bf16.msra.mxu0 0
          %736 = vmatprep.subr.bf16.mxu0 0
          %737 = vmatpush2.bf16.msra.mxu0 0
          %738 = vmatprep.mubr.bf16.mxu0 0
          %739 = vmatmul.mubr.bf16.gmra.mxu0 %v704
          %v740 = vpop.f32.mrf.mxu0
          %v741 = vadd.f32 %v688, %v740
          %v742 = vpop.f32.mrf.mxu0
          %v743 = vpop.f32.mrf.mxu0
          %v744 = vadd.f32 %v688, %v743
          %v745 = vpop.f32.mrf.mxu0
          %746 = vdwg.mxu0
          %v747 = vpack.c.bf16 %v744, %v741
          %v749 = vunpack.c.l.b16 %v747
          %v750 = vunpack.c.h.b16 %v747
          %v751 = vpack.c.b16 %v749, %v749
          %v752 = vpack.c.b16 %v750, %v750
          %vm755 = vcmask 257024
          %756 = vst.msk [vmem:[#allocation2] sm:$0xf] %vm755, %v751
          %757 = vst.msk [vmem:[#allocation2 + $0x4] sm:$0xf] %vm755, %v752
          %758 = vrot.lane.b32.xlu0 %v751, 96
          %v759 = vpop.permute.xlu0 %758
          %760 = vrot.lane.b32.xlu0 %v752, 96
          %v761 = vpop.permute.xlu0 %760
          %764 = vst.msk [vmem:[#allocation3] sm:$0xf] %vm755, %v759
          %765 = vst.msk [vmem:[#allocation3 + $0x4] sm:$0xf] %vm755, %v761
          %766 = vrot.lane.b32.xlu0 %v751, 64
          %v767 = vpop.permute.xlu0 %766
          %768 = vrot.lane.b32.xlu0 %v752, 64
          %v769 = vpop.permute.xlu0 %768
          %772 = vst.msk [vmem:[#allocation4] sm:$0xf] %vm755, %v767
          %773 = vst.msk [vmem:[#allocation4 + $0x4] sm:$0xf] %vm755, %v769
        $region104: #{tpu_custom_call.1} parent=75 // pred_fallthru
          _
        %s774 = smul.u32 %s47, 8
        %s775 = scalar_lea.vmem %s582, %s774 [#allocation5]
        %v776 = vld [vmem:[%s775] sm:$0xff]
        %s777 = sshra.s32 %s774, 3
        %s778 = sand.u32 %s774, 7
        %s779 = smul.addr %s777, 4
        %s780 = scalar_lea.vmem [#allocation2], %s779
        %v781 = vld [vmem:[%s780] sm:$0xf]
        %v782 = vld [vmem:[%s591] sm:$0xff]
        %v783 = vld [vmem:[#allocation3] sm:$0xf]
        %v784 = vld [vmem:[#allocation3 + $0x4] sm:$0xf]
        %v785 = vld [vmem:[#allocation4] sm:$0xf]
        %v786 = vld [vmem:[#allocation4 + $0x4] sm:$0xf]
        %v789 = vunpack.c.l.b16 %v783
        %v790 = vunpack.c.l.b16 %v784
        %v791 = vpack.c.b16 %v790, %v789
        %vm792 = vcmask 130048
        %v794 = vsel %vm792, %v781, 0
        %v797 = vsel %vm792, %v791, 0
        %799 = vmatprep.subr.bf16.mxu0 0
        %800 = vmatpush1.bf16.xpose.msra.mxu0 0
        %801 = vmatprep.subr.bf16.mxu0 0
        %802 = vmatpush1.bf16.xpose.msra.mxu0 0
        %803 = vmatprep.subr.bf16.mxu0 0
        %804 = vmatpush1.bf16.xpose.msra.mxu0 0
        %805 = vmatprep.subr.bf16.mxu0 0
        %806 = vmatpush1.bf16.xpose.msra.mxu0 0
        %807 = vmatprep.subr.bf16.mxu0 0
        %808 = vmatpush1.bf16.xpose.msra.mxu0 0
        %809 = vmatprep.subr.bf16.mxu0 0
        %810 = vmatpush1.bf16.xpose.msra.mxu0 0
        %811 = vmatprep.subr.bf16.mxu0 0
        %812 = vmatpush1.bf16.xpose.msra.mxu0 0
        %813 = vmatprep.subr.bf16.mxu0 0
        %814 = vmatpush1.bf16.xpose.msra.mxu0 %v797
        %815 = vmatprep.subr.bf16.mxu0 0
        %816 = vmatpush2.bf16.xpose.msra.mxu0 0
        %817 = vmatprep.subr.bf16.mxu0 0
        %818 = vmatpush2.bf16.xpose.msra.mxu0 0
        %819 = vmatprep.subr.bf16.mxu0 0
        %820 = vmatpush2.bf16.xpose.msra.mxu0 0
        %821 = vmatprep.subr.bf16.mxu0 0
        %822 = vmatpush2.bf16.xpose.msra.mxu0 0
        %823 = vmatprep.subr.bf16.mxu0 0
        %824 = vmatpush2.bf16.xpose.msra.mxu0 0
        %825 = vmatprep.subr.bf16.mxu0 0
        %826 = vmatpush2.bf16.xpose.msra.mxu0 0
        %827 = vmatprep.subr.bf16.mxu0 0
        %828 = vmatpush2.bf16.xpose.msra.mxu0 0
        %829 = vmatprep.subr.bf16.mxu0 0
        %830 = vmatpush2.bf16.xpose.msra.mxu0 0
        %831 = vmatprep.mubr.bf16.mxu0 0
        %832 = vmatmul.mubr.bf16.gmra.mxu0 %v794
        %v833 = vpop.f32.mrf.mxu0
        %v834 = vadd.f32 %v782, %v833
        %v835 = vpop.f32.mrf.mxu0
        %v836 = vpop.f32.mrf.mxu0
        %v837 = vpop.f32.mrf.mxu0
        %838 = vdwg.mxu0
        %v839 = vsel %vm792, %v834, -inf
        %840 = vmax.xlane.f32.xlu0 %v839
        %v841 = vpop.xlane.xlu0 %840
        %v842 = vsub.f32 %v834, %v841
        %v843 = vmul.f32 %v842, 1.442695
        %v844 = vpow.pop %v843
        %v845 = vsel %vm792, %v844, 0.0
        %846 = vadd.xlane.f32.xlu0 %v845
        %v847 = vpop.xlane.xlu0 %846
        %v848 = vrcp.pop %v847
        %v849 = vmul.f32 %v844, %v848
        %850 = vst.msk [vmem:[%s670] sm:$0xff] %vm792, %v849
        %v851 = vpack.c.bf16 %v849, %v849
        %v854 = vunpack.c.l.b16 %v785
        %v855 = vunpack.c.l.b16 %v786
        %v856 = vpack.c.b16 %v855, %v854
        %v859 = vsel %vm792, %v851, 0
        %861 = vmatprep.subr.bf16.mxu0 0
        %862 = vmatpush1.bf16.msra.mxu0 0
        %863 = vmatprep.subr.bf16.mxu0 0
        %864 = vmatpush1.bf16.msra.mxu0 0
        %865 = vmatprep.subr.bf16.mxu0 0
        %866 = vmatpush1.bf16.msra.mxu0 0
        %867 = vmatprep.subr.bf16.mxu0 0
        %868 = vmatpush1.bf16.msra.mxu0 0
        %869 = vmatprep.subr.bf16.mxu0 0
        %870 = vmatpush1.bf16.msra.mxu0 0
        %871 = vmatprep.subr.bf16.mxu0 0
        %872 = vmatpush1.bf16.msra.mxu0 0
        %873 = vmatprep.subr.bf16.mxu0 0
        %874 = vmatpush1.bf16.msra.mxu0 0
        %875 = vmatprep.subr.bf16.mxu0 0
        %876 = vmatpush1.bf16.msra.mxu0 %v856
        %877 = vmatprep.subr.bf16.mxu0 0
        %878 = vmatpush2.bf16.msra.mxu0 0
        %879 = vmatprep.subr.bf16.mxu0 0
        %880 = vmatpush2.bf16.msra.mxu0 0
        %881 = vmatprep.subr.bf16.mxu0 0
        %882 = vmatpush2.bf16.msra.mxu0 0
        %883 = vmatprep.subr.bf16.mxu0 0
        %884 = vmatpush2.bf16.msra.mxu0 0
        %885 = vmatprep.subr.bf16.mxu0 0
        %886 = vmatpush2.bf16.msra.mxu0 0
        %887 = vmatprep.subr.bf16.mxu0 0
        %888 = vmatpush2.bf16.msra.mxu0 0
        %889 = vmatprep.subr.bf16.mxu0 0
        %890 = vmatpush2.bf16.msra.mxu0 0
        %891 = vmatprep.subr.bf16.mxu0 0
        %892 = vmatpush2.bf16.msra.mxu0 0
        %893 = vmatprep.mubr.bf16.mxu0 0
        %894 = vmatmul.mubr.bf16.gmra.mxu0 %v859
        %v895 = vpop.f32.mrf.mxu0
        %v896 = vadd.f32 0.0, %v895
        %v897 = vpop.f32.mrf.mxu0
        %v898 = vpop.f32.mrf.mxu0
        %v899 = vpop.f32.mrf.mxu0
        %900 = vdwg.mxu0
        %v901 = vld [vmem:[#allocation3] sm:$0xf]
        %v902 = vld [vmem:[#allocation3 + $0x4] sm:$0xf]
        %v903 = vld [vmem:[#allocation4] sm:$0xf]
        %v904 = vld [vmem:[#allocation4 + $0x4] sm:$0xf]
        %v906 = vunpack.c.l.b16 %v781
        %v907 = vpack.c.b16 %v906, %v906
        %908 = vrot.lane.b32.xlu0 %v907, 112
        %v909 = vpop.permute.xlu0 %908
        %v912 = vunpack.c.l.b16 %v901
        %v913 = vunpack.c.l.b16 %v902
        %v914 = vpack.c.b16 %v913, %v912
        %915 = vrot.lane.b32.xlu0 %v914, 112
        %v916 = vpop.permute.xlu0 %915
        %v918 = vsel %vm792, %v909, 0
        %v921 = vsel %vm792, %v916, 0
        %923 = vmatprep.subr.bf16.mxu0 0
        %924 = vmatpush1.bf16.xpose.msra.mxu0 0
        %925 = vmatprep.subr.bf16.mxu0 0
        %926 = vmatpush1.bf16.xpose.msra.mxu0 0
        %927 = vmatprep.subr.bf16.mxu0 0
        %928 = vmatpush1.bf16.xpose.msra.mxu0 0
        %929 = vmatprep.subr.bf16.mxu0 0
        %930 = vmatpush1.bf16.xpose.msra.mxu0 0
        %931 = vmatprep.subr.bf16.mxu0 0
        %932 = vmatpush1.bf16.xpose.msra.mxu0 0
        %933 = vmatprep.subr.bf16.mxu0 0
        %934 = vmatpush1.bf16.xpose.msra.mxu0 0
        %935 = vmatprep.subr.bf16.mxu0 0
        %936 = vmatpush1.bf16.xpose.msra.mxu0 0
        %937 = vmatprep.subr.bf16.mxu0 0
        %938 = vmatpush1.bf16.xpose.msra.mxu0 %v921
        %939 = vmatprep.subr.bf16.mxu0 0
        %940 = vmatpush2.bf16.xpose.msra.mxu0 0
        %941 = vmatprep.subr.bf16.mxu0 0
        %942 = vmatpush2.bf16.xpose.msra.mxu0 0
        %943 = vmatprep.subr.bf16.mxu0 0
        %944 = vmatpush2.bf16.xpose.msra.mxu0 0
        %945 = vmatprep.subr.bf16.mxu0 0
        %946 = vmatpush2.bf16.xpose.msra.mxu0 0
        %947 = vmatprep.subr.bf16.mxu0 0
        %948 = vmatpush2.bf16.xpose.msra.mxu0 0
        %949 = vmatprep.subr.bf16.mxu0 0
        %950 = vmatpush2.bf16.xpose.msra.mxu0 0
        %951 = vmatprep.subr.bf16.mxu0 0
        %952 = vmatpush2.bf16.xpose.msra.mxu0 0
        %953 = vmatprep.subr.bf16.mxu0 0
        %954 = vmatpush2.bf16.xpose.msra.mxu0 0
        %955 = vmatprep.mubr.bf16.mxu0 0
        %956 = vmatmul.mubr.bf16.gmra.mxu0 %v918
        %v957 = vpop.f32.mrf.mxu0
        %v958 = vadd.f32 %v782, %v957
        %v959 = vpop.f32.mrf.mxu0
        %v960 = vpop.f32.mrf.mxu0
        %v961 = vpop.f32.mrf.mxu0
        %962 = vdwg.mxu0
        %v963 = vsel %vm792, %v958, -inf
        %964 = vmax.xlane.f32.xlu0 %v963
        %v965 = vpop.xlane.xlu0 %964
        %v966 = vsub.f32 %v958, %v965
        %v967 = vmul.f32 %v966, 1.442695
        %v968 = vpow.pop %v967
        %v969 = vsel %vm792, %v968, 0.0
        %970 = vadd.xlane.f32.xlu0 %v969
        %v971 = vpop.xlane.xlu0 %970
        %v972 = vrcp.pop %v971
        %v973 = vmul.f32 %v968, %v972
        %s974 = scalar_lea.vmem %s670, 8 [#allocation19]
        %975 = vst.msk [vmem:[%s974] sm:$0xff] %vm792, %v973
        %v976 = vpack.c.bf16 %v973, %v973
        %v979 = vunpack.c.l.b16 %v903
        %v980 = vunpack.c.l.b16 %v904
        %v981 = vpack.c.b16 %v980, %v979
        %982 = vrot.lane.b32.xlu0 %v981, 112
        %v983 = vpop.permute.xlu0 %982
        %v986 = vsel %vm792, %v976, 0
        %988 = vmatprep.subr.bf16.mxu0 0
        %989 = vmatpush1.bf16.msra.mxu0 0
        %990 = vmatprep.subr.bf16.mxu0 0
        %991 = vmatpush1.bf16.msra.mxu0 0
        %992 = vmatprep.subr.bf16.mxu0 0
        %993 = vmatpush1.bf16.msra.mxu0 0
        %994 = vmatprep.subr.bf16.mxu0 0
        %995 = vmatpush1.bf16.msra.mxu0 0
        %996 = vmatprep.subr.bf16.mxu0 0
        %997 = vmatpush1.bf16.msra.mxu0 0
        %998 = vmatprep.subr.bf16.mxu0 0
        %999 = vmatpush1.bf16.msra.mxu0 0
        %1000 = vmatprep.subr.bf16.mxu0 0
        %1001 = vmatpush1.bf16.msra.mxu0 0
        %1002 = vmatprep.subr.bf16.mxu0 0
        %1003 = vmatpush1.bf16.msra.mxu0 %v983
        %1004 = vmatprep.subr.bf16.mxu0 0
        %1005 = vmatpush2.bf16.msra.mxu0 0
        %1006 = vmatprep.subr.bf16.mxu0 0
        %1007 = vmatpush2.bf16.msra.mxu0 0
        %1008 = vmatprep.subr.bf16.mxu0 0
        %1009 = vmatpush2.bf16.msra.mxu0 0
        %1010 = vmatprep.subr.bf16.mxu0 0
        %1011 = vmatpush2.bf16.msra.mxu0 0
        %1012 = vmatprep.subr.bf16.mxu0 0
        %1013 = vmatpush2.bf16.msra.mxu0 0
        %1014 = vmatprep.subr.bf16.mxu0 0
        %1015 = vmatpush2.bf16.msra.mxu0 0
        %1016 = vmatprep.subr.bf16.mxu0 0
        %1017 = vmatpush2.bf16.msra.mxu0 0
        %1018 = vmatprep.subr.bf16.mxu0 0
        %1019 = vmatpush2.bf16.msra.mxu0 0
        %1020 = vmatprep.mubr.bf16.mxu0 0
        %1021 = vmatmul.mubr.bf16.gmra.mxu0 %v986
        %v1022 = vpop.f32.mrf.mxu0
        %v1023 = vadd.f32 0.0, %v1022
        %v1024 = vpop.f32.mrf.mxu0
        %v1025 = vpop.f32.mrf.mxu0
        %v1026 = vpop.f32.mrf.mxu0
        %1027 = vdwg.mxu0
        %1029 = vrot.lane.b32.xlu0 %v1023, 16
        %v1030 = vpop.permute.xlu0 %1029
        %v1032 = vsel %vm792, %v896, %v1030
        %vm1033 = vcmask 261120
        %1034 = vst.msk [vmem:[%s663] sm:$0xff] %vm1033, %v1032
        %v1035 = vpack.c.bf16 %v1032, %v1032
        %v1036 = vld [vmem:[#allocation11] sm:$0xf]
        %v1037 = vld [vmem:[#allocation11 + $0x4] sm:$0xf]
        %v1038 = vld [vmem:[#allocation11 + $0x8] sm:$0xf]
        %v1039 = vld [vmem:[#allocation11 + $0xc] sm:$0xf]
        %v1040 = vld [vmem:[%s5] sm:$0x1]
        %v1042 = vlaneseq
        %v1043 = vshrl.u32 %v1042, 7
        %v1044 = vsub.s32 0, %v1043
        %v1045 = vrot.slane %v1040, %v1044
        %v1051 = vunpack.c.l.b16 %v1036
        %v1052 = vunpack.c.l.b16 %v1037
        %v1053 = vunpack.c.l.b16 %v1038
        %v1054 = vunpack.c.l.b16 %v1039
        %v1055 = vpack.c.b16 %v1052, %v1051
        %v1056 = vpack.c.b16 %v1054, %v1053
        %v1060 = vsel %vm1033, %v1035, 0
        %1062 = vmatprep.subr.bf16.mxu0 0
        %1063 = vmatpush1.bf16.msra.mxu0 0
        %1064 = vmatprep.subr.bf16.mxu0 0
        %1065 = vmatpush1.bf16.msra.mxu0 0
        %1066 = vmatprep.subr.bf16.mxu0 0
        %1067 = vmatpush1.bf16.msra.mxu0 0
        %1068 = vmatprep.subr.bf16.mxu0 0
        %1069 = vmatpush1.bf16.msra.mxu0 0
        %1070 = vmatprep.subr.bf16.mxu0 0
        %1071 = vmatpush1.bf16.msra.mxu0 0
        %1072 = vmatprep.subr.bf16.mxu0 0
        %1073 = vmatpush1.bf16.msra.mxu0 0
        %1074 = vmatprep.subr.bf16.mxu0 0
        %1075 = vmatpush1.bf16.msra.mxu0 %v1056
        %1076 = vmatprep.subr.bf16.mxu0 0
        %1077 = vmatpush1.bf16.msra.mxu0 %v1055
        %1078 = vmatprep.subr.bf16.mxu0 0
        %1079 = vmatpush2.bf16.msra.mxu0 0
        %1080 = vmatprep.subr.bf16.mxu0 0
        %1081 = vmatpush2.bf16.msra.mxu0 0
        %1082 = vmatprep.subr.bf16.mxu0 0
        %1083 = vmatpush2.bf16.msra.mxu0 0
        %1084 = vmatprep.subr.bf16.mxu0 0
        %1085 = vmatpush2.bf16.msra.mxu0 0
        %1086 = vmatprep.subr.bf16.mxu0 0
        %1087 = vmatpush2.bf16.msra.mxu0 0
        %1088 = vmatprep.subr.bf16.mxu0 0
        %1089 = vmatpush2.bf16.msra.mxu0 0
        %1090 = vmatprep.subr.bf16.mxu0 0
        %1091 = vmatpush2.bf16.msra.mxu0 0
        %1092 = vmatprep.subr.bf16.mxu0 0
        %1093 = vmatpush2.bf16.msra.mxu0 0
        %1094 = vmatprep.mubr.bf16.mxu0 0
        %1095 = vmatmul.mubr.bf16.gmra.mxu0 %v1060
        %v1096 = vpop.f32.mrf.mxu0
        %v1097 = vadd.f32 %v1045, %v1096
        %v1098 = vpop.f32.mrf.mxu0
        %v1099 = vpop.f32.mrf.mxu0
        %v1100 = vpop.f32.mrf.mxu0
        %1101 = vdwg.mxu0
        %v1102 = vadd.f32 %v776, %v1097
        %v1103 = vsel %vm1033, %v1102, 0.0
        %1104 = vadd.xlane.f32.xlu0 %v1103
        %v1105 = vpop.xlane.xlu0 %1104
        %v1106 = vrcp.pop 32.0
        %v1107 = vmul.f32 %v1105, %v1106
        %v1108 = vsub.f32 %v1102, %v1107
        %v1109 = vmul.f32 %v1108, %v1108
        %v1110 = vsel %vm1033, %v1109, 0.0
        %1111 = vadd.xlane.f32.xlu0 %v1110
        %v1112 = vpop.xlane.xlu0 %1111
        %v1113 = vmul.f32 %v1112, %v1106
        %v1114 = vadd.f32 %v1113, 1e-05
        %v1115 = vrsqrt.pop %v1114
        %v1116 = vmul.f32 %v1108, %v1115
        %v1117 = vld [vmem:[%s10] sm:$0x1]
        %v1119 = vlaneseq
        %v1120 = vshrl.u32 %v1119, 7
        %v1121 = vsub.s32 0, %v1120
        %v1122 = vrot.slane %v1117, %v1121
        %v1124 = vmul.f32 %v1116, %v1122
        %v1125 = vld [vmem:[%s11] sm:$0x1]
        %v1127 = vlaneseq
        %v1128 = vshrl.u32 %v1127, 7
        %v1129 = vsub.s32 0, %v1128
        %v1130 = vrot.slane %v1125, %v1129
        %v1132 = vadd.f32 %v1124, %v1130
        %v1133 = vpack.c.bf16 %v1132, %v1132
        %v1134 = vld [vmem:[#allocation13] sm:$0xf]
        %v1135 = vld [vmem:[#allocation13 + $0x4] sm:$0xf]
        %v1136 = vld [vmem:[#allocation13 + $0x8] sm:$0xf]
        %v1137 = vld [vmem:[#allocation13 + $0xc] sm:$0xf]
        %v1138 = vld [vmem:[%s7] sm:$0x1]
        %v1140 = vlaneseq
        %v1141 = vshrl.u32 %v1140, 7
        %v1142 = vsub.s32 0, %v1141
        %v1143 = vrot.slane %v1138, %v1142
        %v1149 = vunpack.c.l.b16 %v1134
        %v1150 = vunpack.c.l.b16 %v1135
        %v1151 = vunpack.c.l.b16 %v1136
        %v1152 = vunpack.c.l.b16 %v1137
        %v1153 = vpack.c.b16 %v1150, %v1149
        %v1154 = vpack.c.b16 %v1152, %v1151
        %v1158 = vsel %vm1033, %v1133, 0
        %1160 = vmatprep.subr.bf16.mxu0 0
        %1161 = vmatpush1.bf16.msra.mxu0 0
        %1162 = vmatprep.subr.bf16.mxu0 0
        %1163 = vmatpush1.bf16.msra.mxu0 0
        %1164 = vmatprep.subr.bf16.mxu0 0
        %1165 = vmatpush1.bf16.msra.mxu0 0
        %1166 = vmatprep.subr.bf16.mxu0 0
        %1167 = vmatpush1.bf16.msra.mxu0 0
        %1168 = vmatprep.subr.bf16.mxu0 0
        %1169 = vmatpush1.bf16.msra.mxu0 0
        %1170 = vmatprep.subr.bf16.mxu0 0
        %1171 = vmatpush1.bf16.msra.mxu0 0
        %1172 = vmatprep.subr.bf16.mxu0 0
        %1173 = vmatpush1.bf16.msra.mxu0 %v1154
        %1174 = vmatprep.subr.bf16.mxu0 0
        %1175 = vmatpush1.bf16.msra.mxu0 %v1153
        %1176 = vmatprep.subr.bf16.mxu0 0
        %1177 = vmatpush2.bf16.msra.mxu0 0
        %1178 = vmatprep.subr.bf16.mxu0 0
        %1179 = vmatpush2.bf16.msra.mxu0 0
        %1180 = vmatprep.subr.bf16.mxu0 0
        %1181 = vmatpush2.bf16.msra.mxu0 0
        %1182 = vmatprep.subr.bf16.mxu0 0
        %1183 = vmatpush2.bf16.msra.mxu0 0
        %1184 = vmatprep.subr.bf16.mxu0 0
        %1185 = vmatpush2.bf16.msra.mxu0 0
        %1186 = vmatprep.subr.bf16.mxu0 0
        %1187 = vmatpush2.bf16.msra.mxu0 0
        %1188 = vmatprep.subr.bf16.mxu0 0
        %1189 = vmatpush2.bf16.msra.mxu0 0
        %1190 = vmatprep.subr.bf16.mxu0 0
        %1191 = vmatpush2.bf16.msra.mxu0 0
        %1192 = vmatprep.mubr.bf16.mxu0 0
        %1193 = vmatmul.mubr.bf16.gmra.mxu0 %v1158
        %v1194 = vpop.f32.mrf.mxu0
        %v1195 = vadd.f32 %v1143, %v1194
        %v1196 = vpop.f32.mrf.mxu0
        %v1197 = vpop.f32.mrf.mxu0
        %v1198 = vpop.f32.mrf.mxu0
        %1199 = vdwg.mxu0
        %v1200 = vmax.f32 %v1195, 0.0
        %v1201 = vpack.c.bf16 %v1200, %v1200
        %v1202 = vld [vmem:[#allocation14] sm:$0xf]
        %v1203 = vld [vmem:[#allocation14 + $0x4] sm:$0xf]
        %v1204 = vld [vmem:[#allocation14 + $0x8] sm:$0xf]
        %v1205 = vld [vmem:[#allocation14 + $0xc] sm:$0xf]
        %v1206 = vld [vmem:[%s9] sm:$0x1]
        %v1208 = vlaneseq
        %v1209 = vshrl.u32 %v1208, 7
        %v1210 = vsub.s32 0, %v1209
        %v1211 = vrot.slane %v1206, %v1210
        %v1217 = vunpack.c.l.b16 %v1202
        %v1218 = vunpack.c.l.b16 %v1203
        %v1219 = vunpack.c.l.b16 %v1204
        %v1220 = vunpack.c.l.b16 %v1205
        %v1221 = vpack.c.b16 %v1218, %v1217
        %v1222 = vpack.c.b16 %v1220, %v1219
        %v1226 = vsel %vm1033, %v1201, 0
        %1228 = vmatprep.subr.bf16.mxu0 0
        %1229 = vmatpush1.bf16.msra.mxu0 0
        %1230 = vmatprep.subr.bf16.mxu0 0
        %1231 = vmatpush1.bf16.msra.mxu0 0
        %1232 = vmatprep.subr.bf16.mxu0 0
        %1233 = vmatpush1.bf16.msra.mxu0 0
        %1234 = vmatprep.subr.bf16.mxu0 0
        %1235 = vmatpush1.bf16.msra.mxu0 0
        %1236 = vmatprep.subr.bf16.mxu0 0
        %1237 = vmatpush1.bf16.msra.mxu0 0
        %1238 = vmatprep.subr.bf16.mxu0 0
        %1239 = vmatpush1.bf16.msra.mxu0 0
        %1240 = vmatprep.subr.bf16.mxu0 0
        %1241 = vmatpush1.bf16.msra.mxu0 %v1222
        %1242 = vmatprep.subr.bf16.mxu0 0
        %1243 = vmatpush1.bf16.msra.mxu0 %v1221
        %1244 = vmatprep.subr.bf16.mxu0 0
        %1245 = vmatpush2.bf16.msra.mxu0 0
        %1246 = vmatprep.subr.bf16.mxu0 0
        %1247 = vmatpush2.bf16.msra.mxu0 0
        %1248 = vmatprep.subr.bf16.mxu0 0
        %1249 = vmatpush2.bf16.msra.mxu0 0
        %1250 = vmatprep.subr.bf16.mxu0 0
        %1251 = vmatpush2.bf16.msra.mxu0 0
        %1252 = vmatprep.subr.bf16.mxu0 0
        %1253 = vmatpush2.bf16.msra.mxu0 0
        %1254 = vmatprep.subr.bf16.mxu0 0
        %1255 = vmatpush2.bf16.msra.mxu0 0
        %1256 = vmatprep.subr.bf16.mxu0 0
        %1257 = vmatpush2.bf16.msra.mxu0 0
        %1258 = vmatprep.subr.bf16.mxu0 0
        %1259 = vmatpush2.bf16.msra.mxu0 0
        %1260 = vmatprep.mubr.bf16.mxu0 0
        %1261 = vmatmul.mubr.bf16.gmra.mxu0 %v1226
        %v1262 = vpop.f32.mrf.mxu0
        %v1263 = vadd.f32 %v1211, %v1262
        %v1264 = vpop.f32.mrf.mxu0
        %v1265 = vpop.f32.mrf.mxu0
        %v1266 = vpop.f32.mrf.mxu0
        %1267 = vdwg.mxu0
        %v1268 = vadd.f32 %v1132, %v1263
        %v1269 = vsel %vm1033, %v1268, 0.0
        %1270 = vadd.xlane.f32.xlu0 %v1269
        %v1271 = vpop.xlane.xlu0 %1270
        %v1272 = vmul.f32 %v1271, %v1106
        %v1273 = vsub.f32 %v1268, %v1272
        %v1274 = vmul.f32 %v1273, %v1273
        %v1275 = vsel %vm1033, %v1274, 0.0
        %1276 = vadd.xlane.f32.xlu0 %v1275
        %v1277 = vpop.xlane.xlu0 %1276
        %v1278 = vmul.f32 %v1277, %v1106
        %v1279 = vadd.f32 %v1278, 1e-05
        %v1280 = vrsqrt.pop %v1279
        %v1281 = vmul.f32 %v1273, %v1280
        %v1282 = vld [vmem:[%s12] sm:$0x1]
        %v1284 = vlaneseq
        %v1285 = vshrl.u32 %v1284, 7
        %v1286 = vsub.s32 0, %v1285
        %v1287 = vrot.slane %v1282, %v1286
        %v1289 = vmul.f32 %v1281, %v1287
        %v1290 = vld [vmem:[%s13] sm:$0x1]
        %v1292 = vlaneseq
        %v1293 = vshrl.u32 %v1292, 7
        %v1294 = vsub.s32 0, %v1293
        %v1295 = vrot.slane %v1290, %v1294
        %v1297 = vadd.f32 %v1289, %v1295
        %1298 = vst.msk [vmem:[%s656] sm:$0xff] %vm1033, %v1297
        %s1299 = sand.u32 %s368, 1
        %s1300 = scalar_lea.sflag [#allocation7], %s1299
        %s1301 = sand.u32 %s368, 1
        %s1302 = smul.addr %s1301, 8
        %s1303 = scalar_lea.vmem [#allocation16], %s1302
        %s1304 = sand.u32 %s42, 1
        %s1305 = scalar_lea.sflag [#allocation18], %s1304
        %s1306 = sand.u32 %s396, 1
        %s1307 = smul.addr %s1306, 8
        %s1308 = scalar_lea.vmem [#allocation17], %s1307
        %s1309 = sand.u32 %s42, 1
        %s1310 = scalar_lea.sflag [#allocation18], %s1309
        %s1311 = sand.u32 %s424, 1
        %s1312 = smul.addr %s1311, 16
        %s1313 = scalar_lea.vmem [#allocation19], %s1312
        // Predicated region
        $region105: #{tpu_custom_call.1} parent=75 // pred_check
          %p1314 = pneg %p378
        $region106: #{tpu_custom_call.1} parent=75 // pred_check_branch
          %1316 = sbr.rel (%p1314) target = $region108
        $region107: #{tpu_custom_call.1} parent=75 // pred_region
          %s1318 = ssub.s32 128, 128
          %1319 = vsyncadd %s1300, %s1318
          %s1320 = smul.addr %s46, 2
          %s1321 = sadd.s32 %s47, %s1320
          %s1322 = smul.addr %s1321, 128
          %s1323 = scalar_lea.hbm %s14, %s1322
          %s1325 = sshll.u32 %s1303, 4
          %s1326 = int_to_ptr.vmem [resolvable:$true] %s1325
          %1328 = dma.vmem_to_hbm [thread:$0]  %s1326, 128, %s1323, %s1300
        $region108: #{tpu_custom_call.1} parent=75 // pred_fallthru
          _
        // Predicated region
        $region109: #{tpu_custom_call.1} parent=75 // pred_check
          %p1329 = pneg %p406
        $region110: #{tpu_custom_call.1} parent=75 // pred_check_branch
          %1331 = sbr.rel (%p1329) target = $region112
        $region111: #{tpu_custom_call.1} parent=75 // pred_region
          %s1333 = ssub.s32 128, 128
          %1334 = vsyncadd %s1305, %s1333
          %s1335 = smul.addr %s46, 2
          %s1336 = sadd.s32 %s47, %s1335
          %s1337 = smul.addr %s1336, 128
          %s1338 = scalar_lea.hbm %s15, %s1337
          %s1340 = sshll.u32 %s1308, 4
          %s1341 = int_to_ptr.vmem [resolvable:$true] %s1340
          %1343 = dma.vmem_to_hbm [thread:$0]  %s1341, 128, %s1338, %s1305
        $region112: #{tpu_custom_call.1} parent=75 // pred_fallthru
          _
        // Predicated region
        $region113: #{tpu_custom_call.1} parent=75 // pred_check
          %p1344 = pneg %p434
        $region114: #{tpu_custom_call.1} parent=75 // pred_check_branch
          %1346 = sbr.rel (%p1344) target = $region116
        $region115: #{tpu_custom_call.1} parent=75 // pred_region
          %s1348 = ssub.s32 256, 256
          %1349 = vsyncadd %s1310, %s1348
          %s1350 = smul.addr %s46, 4
          %s1351 = sadd.s32 %s47, %s1350
          %s1352 = smul.addr %s1351, 128
          %s1353 = scalar_lea.hbm %s16, %s1352
          %s1354 = sshll.u32 %s1313, 4
          %s1355 = int_to_ptr.vmem [resolvable:$true] %s1354
          %1360 = dma.vmem_to_hbm [thread:$0]  %s1355, 256, %s1353, %s1310, 128, 256, 8
        $region116: #{tpu_custom_call.1} parent=75 // pred_fallthru
          _
      $region76: #{tpu_custom_call.1} parent=5 // pred_fallthru
        _
      %p1361 = scmp.le.s32.totalorder 2, %s37
      // Predicated region
      $region117: #{tpu_custom_call.1} parent=5 // pred_check
        %p1362 = pneg %p1361
      $region118: #{tpu_custom_call.1} parent=5 // pred_check_branch
        %1364 = sbr.rel (%p1362) target = $region120
      $region119: #{tpu_custom_call.1} parent=5 // pred_region
        %s1365 = ssub.s32 %s37, 2
        // Predicated region
        $region121: #{tpu_custom_call.1} parent=119 // pred_check
          %p1366 = pneg %p384
        $region122: #{tpu_custom_call.1} parent=119 // pred_check_branch
          %1368 = sbr.rel (%p1366) target = $region124
        $region123: #{tpu_custom_call.1} parent=119 // pred_region
          %s1369 = sand.u32 %s369, 1
          %s1370 = scalar_lea.sflag [#allocation7], %s1369
          %s1371 = sand.u32 %s369, 1
          %s1372 = smul.addr %s1371, 8
          %s1373 = scalar_lea.vmem [#allocation16], %s1372
          %1374 = dma.done %s1370, 128
        $region124: #{tpu_custom_call.1} parent=119 // pred_fallthru
          _
        // Predicated region
        $region125: #{tpu_custom_call.1} parent=119 // pred_check
          %p1375 = pneg %p412
        $region126: #{tpu_custom_call.1} parent=119 // pred_check_branch
          %1377 = sbr.rel (%p1375) target = $region128
        $region127: #{tpu_custom_call.1} parent=119 // pred_region
          %s1378 = sand.u32 %s43, 1
          %s1379 = scalar_lea.sflag [#allocation18], %s1378
          %s1380 = sand.u32 %s397, 1
          %s1381 = smul.addr %s1380, 8
          %s1382 = scalar_lea.vmem [#allocation17], %s1381
          %1383 = dma.done %s1379, 128
        $region128: #{tpu_custom_call.1} parent=119 // pred_fallthru
          _
        // Predicated region
        $region129: #{tpu_custom_call.1} parent=119 // pred_check
          %p1384 = pneg %p440
        $region130: #{tpu_custom_call.1} parent=119 // pred_check_branch
          %1386 = sbr.rel (%p1384) target = $region132
        $region131: #{tpu_custom_call.1} parent=119 // pred_region
          %s1387 = sand.u32 %s43, 1
          %s1388 = scalar_lea.sflag [#allocation18], %s1387
          %s1389 = sand.u32 %s425, 1
          %s1390 = smul.addr %s1389, 16
          %s1391 = scalar_lea.vmem [#allocation19], %s1390
          %1392 = dma.done %s1388, 256
        $region132: #{tpu_custom_call.1} parent=119 // pred_fallthru
          _
      $region120: #{tpu_custom_call.1} parent=5 // pred_fallthru
        _
    $region6: #{tpu_custom_call.1} parent=1 // loop_footer
      %s41 = sadd.s32 1, %s37
    $region7: #{tpu_custom_call.1} parent=1 // loop_footer_branch
      %36 = sbr.rel target = $region3
    $region8: #{tpu_custom_call.1} parent=1 // loop_exit
      _
    %1393 = vsyncpa [#allocation6], 1
    %s1394 = scalar_lea.sflag [#allocation6], 1
    %1395 = vsyncpa %s1394, 1
    %1396 = vsyncpa [#allocation9], 1
    %s1397 = scalar_lea.sflag [#allocation9], 1
    %1398 = vsyncpa %s1397, 1
    %1399 = vsyncpa [#allocation12], 1
    %1400 = vsyncpa [#allocation15], 1
    %1401 = vsyncpa [#allocation7], 1
    %s1402 = scalar_lea.sflag [#allocation7], 1
    %1403 = vsyncpa %s1402, 1
    %1404 = vsyncpa [#allocation18], 1
    %s1405 = scalar_lea.sflag [#allocation18], 1
    %1406 = vsyncpa %s1405, 1

</llo_original>
